<compile_context>
chip_gen: v7x
topology: tpu7x:2x2x1
jax: 0.10.0
libtpu: 0.0.40
codegen_flags: <defaults>
</compile_context>

<pallas_src>
import functools

import jax
import jax.numpy as jnp
from jax import lax
from jax.experimental import pallas as pl
from jax.experimental.pallas import tpu as pltpu

_N_SUMS = 10                       # loss partial sums per (batch, tile) block
_OUT_SUBLANES = 16                 # >= _N_SUMS, multiple of 8 (lane-dense out)
_HALO = 8                          # extra rows DMA'd for the 3x3 row halo
_LANE = 128
_MAX_ROW_TILE = 512
_VMEM_BUDGET = 36 * 1024 * 1024    # working-set target when choosing the tile
_VMEM_LIMIT = 48 * 1024 * 1024     # scoped VMEM limit (< v7x's 64 MiB physical)


def _round_up(x, m):
    return (x + m - 1) // m * m


def _choose_row_tile(h, w_pad):
    """Largest multiple-of-8 row tile whose working set fits the VMEM budget."""
    per_row = w_pad * 4  # f32 bytes per row

    def working_set(th):
        # 7 double-buffered main blocks + 5 double-buffered halo blocks
        # + ~20 live (th, w) f32 temporaries + double-buffered output block.
        return (2 * 7 * th + 2 * 5 * _HALO + 20 * th + 2 * _OUT_SUBLANES) * per_row

    th = min(_MAX_ROW_TILE, _round_up(max(h, 8), 8))
    while th > 8 and working_set(th) > _VMEM_BUDGET:
        th -= 8
    return th


def _make_kernel(h, w, th, w_pad, h_pad, binary_gt):
    """Builds the fused loss kernel for one (batch, row-tile) grid step."""
    padded = (h_pad != h) or (w_pad != w)

    def kernel(fp_ref, o1_ref, o2_ref, o3_ref, gt_ref, m1_ref, m2_ref,
               fph_ref, o1h_ref, o2h_ref, o3h_ref, gth_ref, out_ref):
        f32 = jnp.float32
        row0 = pl.program_id(1) * th

        fp = fp_ref[0].astype(f32)          # (th, w_pad)
        o1 = o1_ref[0].astype(f32)
        o2 = o2_ref[0].astype(f32)
        o3 = o3_ref[0].astype(f32)
        gt = gt_ref[0].astype(f32)
        m1 = m1_ref[0].astype(f32)
        m2 = m2_ref[0].astype(f32)

        # Validity masks, computed once per tile and reused by every reduction.
        sub = row0 + lax.broadcasted_iota(jnp.int32, (th, w_pad), 0)
        lane = lax.broadcasted_iota(jnp.int32, (th, w_pad), 1)
        grad_mask = (sub < (h - 2)) & (lane < (w - 2))      # valid-conv outputs
        pix_mask = ((sub < h) & (lane < w)) if padded else None

        def tile_sum(x, mask):
            # Sublane-only reduction -> (1, w_pad) lane-vector partials.  The
            # cross-lane reduce happens in the JAX epilogue, not per grid step.
            if mask is not None:
                x = jnp.where(mask, x, 0.0)
            return jnp.sum(x, axis=0, keepdims=True)

        def grad_mag(x0, halo):
            # Valid 3x3 conv with the fixed edge kernels
            #   a = [[0,0,0],[1,0,-1],[0,0,0]],  b = [[0,1,0],[0,0,0],[0,-1,0]]
            # as shift-and-subtract.  Lane shifts via pltpu.roll (positive
            # shift == np.roll semantics: result[c] = x[(c - shift) % W], so a
            # shift of W-k reads x[c+k]); wrapped/overhanging cells are removed
            # by grad_mask.  Intermediates stay dense (th, w_pad) tiles.
            x = jnp.concatenate([x0, halo], axis=0)          # (th + 8, w_pad)
            x1 = x[1:th + 1]                                 # rows r + 1
            x2 = x[2:th + 2]                                 # rows r + 2
            gx = x1 - pltpu.roll(x1, shift=w_pad - 2, axis=1)    # x[r+1,c]-x[r+1,c+2]
            gy = pltpu.roll(x0 - x2, shift=w_pad - 1, axis=1)    # x[r,c+1]-x[r+2,c+1]
            return jnp.sqrt(gx * gx + gy * gy)               # (th, w_pad)

        # gt gradient magnitude: computed ONCE, reused by all four edge losses.
        gt_g = grad_mag(gt, gth_ref[0].astype(f32))

        def smooth_l1_rows(pred_g):
            d = pred_g - gt_g
            ad = jnp.abs(d)
            return tile_sum(jnp.where(ad < 1.0, 0.5 * d * d, ad - 0.5), grad_mask)

        one_minus_gt = 1.0 - gt          # hoisted: shared by BCE and psw/psw1
        gt_is_one = gt > 0.5

        def bce_binary_rows(pred, one_minus_pred):
            # gt in {0,1}: one log per element (PyTorch clamps log at -100).
            p = jnp.where(gt_is_one, pred, one_minus_pred)
            return tile_sum(-jnp.maximum(jnp.log(p), -100.0), pix_mask)

        def bce_soft_rows(pred, one_minus_pred, tgt, one_minus_tgt):
            term = -(tgt * jnp.maximum(jnp.log(pred), -100.0)
                     + one_minus_tgt * jnp.maximum(jnp.log(one_minus_pred), -100.0))
            return tile_sum(term, pix_mask)

        preds = (fp, o1, o2, o3)
        one_minus = tuple(1.0 - p for p in preds)    # hoisted, reused below
        halos = (fph_ref, o1h_ref, o2h_ref, o3h_ref)

        rows = []
        for p, om, hr in zip(preds, one_minus, halos):
            if binary_gt:
                rows.append(bce_binary_rows(p, om))
            else:
                rows.append(bce_soft_rows(p, om, gt, one_minus_gt))
            rows.append(smooth_l1_rows(grad_mag(p, hr[0].astype(f32))))

        # Switch pseudo-targets (torch.no_grad in the reference; same forward
        # value), never materialised in HBM.  Soft targets -> 2-log BCE.
        psw = jnp.clip(o1 * gt + one_minus[1] * one_minus_gt, 0.0, 1.0)
        psw1 = jnp.clip((1.0 - psw) * (o2 * gt + one_minus[2] * one_minus_gt),
                        0.0, 1.0)
        rows.append(bce_soft_rows(m1, 1.0 - m1, psw, 1.0 - psw))
        rows.append(bce_soft_rows(m2, 1.0 - m2, psw1, 1.0 - psw1))

        rows.append(jnp.zeros((_OUT_SUBLANES - len(rows), w_pad), jnp.float32))
        # One unmasked, lane-dense (16, w_pad) store per grid step.
        out_ref[0, 0] = jnp.concatenate(rows, axis=0)

    return kernel


def _squeeze_nchw(t):
    n, c, h, w = t.shape
    assert c == 1, "expected a single-channel NCHW tensor"
    return t.reshape(n, h, w)


def head_aux_fuse_loss_for_14_5(out, gt, *, assume_binary_gt=True,
                                storage_dtype=None, row_tile=None):
    """Forward of head_Aux_fuse_loss_for_14_5 as one fused Pallas TPU kernel.

    assume_binary_gt: gt is a {0,1} mask (true for this head) -> single-log
      BCE for the four gt-vs-pred terms; set False for soft targets.
    storage_dtype: optional HBM-side cast (e.g. jnp.bfloat16) to halve DMA
      bytes on bandwidth-bound chips (v5e/v6e); compute stays f32 in-kernel.
    row_tile: optional row-tile override (multiple of 8); auto-chosen to fit
      the VMEM budget when None.
    """
    fp, o1, o2, o3 = out[0], out[1], out[2], out[3]
    # TODO(synk): split_tensor(3) is not given in the spec; assumed to be a
    # channel-wise split of the 3-channel switch map (mask3 unused here).
    m = out[4]
    mask1, mask2 = m[:, 0:1], m[:, 1:2]

    n, c, h, w = gt.shape
    tensors = [_squeeze_nchw(t) for t in (fp, o1, o2, o3, gt, mask1, mask2)]
    if storage_dtype is not None:
        tensors = [t.astype(storage_dtype) for t in tensors]

    w_pad = _round_up(w, _LANE)
    if row_tile is None:
        th = _choose_row_tile(h, w_pad)
    else:
        th = max(8, _round_up(int(row_tile), 8))
    n_tiles = -(-h // th)
    h_pad = n_tiles * th

    if (h_pad, w_pad) != (h, w):
        # Pad with 0.5 (keeps every log finite); padded pixels are masked out
        # of every reduction inside the kernel.
        tensors = [jnp.pad(t, ((0, 0), (0, h_pad - h), (0, w_pad - w)),
                           constant_values=0.5) for t in tensors]
    fp_s, o1_s, o2_s, o3_s, gt_s, m1_s, m2_s = tensors

    main_spec = pl.BlockSpec((1, th, w_pad), lambda b, t: (b, t, 0))
    # 8-row halo block = first rows of the NEXT tile (clamped for the last
    # tile, where those gradient rows are masked out anyway).
    halo_per_tile = th // _HALO
    last_halo = h_pad // _HALO - 1
    halo_spec = pl.BlockSpec(
        (1, _HALO, w_pad),
        lambda b, t: (b, jnp.minimum((t + 1) * halo_per_tile, last_halo), 0))
    out_spec = pl.BlockSpec((1, 1, _OUT_SUBLANES, w_pad),
                            lambda b, t: (b, t, 0, 0))

    npix = n * h_pad * w_pad
    cost = pl.CostEstimate(
        flops=120 * npix,
        transcendentals=(13 if assume_binary_gt else 17) * npix,
        bytes_accessed=4 * (7 * npix + 5 * _HALO * w_pad * n * n_tiles
                            + _OUT_SUBLANES * w_pad * n * n_tiles))

    kernel = _make_kernel(h, w, th, w_pad, h_pad, assume_binary_gt)
    partial = pl.pallas_call(
        kernel,
        out_shape=jax.ShapeDtypeStruct((n, n_tiles, _OUT_SUBLANES, w_pad),
                                       jnp.float32),
        grid=(n, n_tiles),
        in_specs=[main_spec] * 7 + [halo_spec] * 5,
        out_specs=out_spec,
        compiler_params=pltpu.CompilerParams(
            dimension_semantics=("parallel", "parallel"),
            vmem_limit_bytes=_VMEM_LIMIT),
        cost_estimate=cost,
    )(fp_s, o1_s, o2_s, o3_s, gt_s, m1_s, m2_s,
      fp_s, o1_s, o2_s, o3_s, gt_s)

    # Epilogue: one reduction over (batch, tile, lane) + per-loss mean/weight.
    sums = jnp.sum(partial[:, :, :_N_SUMS, :], axis=(0, 1, 3))

    pix = float(n * c * h * w)                 # BCE mean denominator
    epix = float(n * c * (h - 2) * (w - 2))    # valid-conv mean denominator
    #        fpls(bce,edge) flrd      flr       fld       sw    sw1
    denoms = jnp.array([pix, epix, pix, epix, pix, epix, pix, epix, pix, pix],
                       jnp.float32)
    weights = jnp.array([2.0, 2.0, 1.0, 1.0, 1.0, 1.0, 1.0, 1.0, 0.1, 0.1],
                        jnp.float32)
    return jnp.sum(sums / denoms * weights)


if __name__ == "__main__":
    key = jax.random.PRNGKey(0)
    N, H, W = 2, 16, 128
    keys = jax.random.split(key, 6)

    def make_pred(k, c=1):
        return jax.nn.sigmoid(jax.random.normal(k, (N, c, H, W), jnp.float32))

    out = [make_pred(keys[0]), make_pred(keys[1]), make_pred(keys[2]),
           make_pred(keys[3]), make_pred(keys[4], c=3)]
    gt = (jax.random.uniform(keys[5], (N, 1, H, W)) > 0.5).astype(jnp.float32)

    loss = jax.block_until_ready(jax.jit(head_aux_fuse_loss_for_14_5)(out, gt))

    # Also exercise the row-tiled (halo) path and check self-consistency.
    loss_tiled = jax.block_until_ready(
        jax.jit(functools.partial(head_aux_fuse_loss_for_14_5, row_tile=8))(out, gt))
    if not jnp.allclose(loss, loss_tiled, rtol=1e-4, atol=1e-5):
        raise AssertionError(
            f"row-tiled result mismatch: {loss} vs {loss_tiled}")

    print("KERNEL_OK")
</pallas_src>

<mosaic_0001>
module attributes {stable_mosaic.version = 11 : i64} {
  func.func @kernel(%arg0: i32, %arg1: i32, %arg2: memref<1x16x128xf32, #tpu.memory_space<vmem>>, %arg3: memref<1x16x128xf32, #tpu.memory_space<vmem>>, %arg4: memref<1x16x128xf32, #tpu.memory_space<vmem>>, %arg5: memref<1x16x128xf32, #tpu.memory_space<vmem>>, %arg6: memref<1x16x128xf32, #tpu.memory_space<vmem>>, %arg7: memref<1x16x128xf32, #tpu.memory_space<vmem>>, %arg8: memref<1x16x128xf32, #tpu.memory_space<vmem>>, %arg9: memref<1x8x128xf32, #tpu.memory_space<vmem>>, %arg10: memref<1x8x128xf32, #tpu.memory_space<vmem>>, %arg11: memref<1x8x128xf32, #tpu.memory_space<vmem>>, %arg12: memref<1x8x128xf32, #tpu.memory_space<vmem>>, %arg13: memref<1x8x128xf32, #tpu.memory_space<vmem>>, %arg14: memref<1x1x16x128xf32, #tpu.memory_space<vmem>>) attributes {dimension_semantics = [#tpu.dimension_semantics<parallel>, #tpu.dimension_semantics<parallel>], iteration_bounds = array<i64: 2, 1>, scalar_prefetch = 0 : i64, scratch_operands = 0 : i64, tpu.core_type = #tpu.core_type<tc>, window_params = [{transform_indices = @transform_0, window_bounds = array<i64: 1, 16, 128>}, {transform_indices = @transform_1, window_bounds = array<i64: 1, 16, 128>}, {transform_indices = @transform_2, window_bounds = array<i64: 1, 16, 128>}, {transform_indices = @transform_3, window_bounds = array<i64: 1, 16, 128>}, {transform_indices = @transform_4, window_bounds = array<i64: 1, 16, 128>}, {transform_indices = @transform_5, window_bounds = array<i64: 1, 16, 128>}, {transform_indices = @transform_6, window_bounds = array<i64: 1, 16, 128>}, {transform_indices = @transform_7, window_bounds = array<i64: 1, 8, 128>}, {transform_indices = @transform_8, window_bounds = array<i64: 1, 8, 128>}, {transform_indices = @transform_9, window_bounds = array<i64: 1, 8, 128>}, {transform_indices = @transform_10, window_bounds = array<i64: 1, 8, 128>}, {transform_indices = @transform_11, window_bounds = array<i64: 1, 8, 128>}, {transform_indices = @transform_12, window_bounds = array<i64: 1, 1, 16, 128>}]} {
    %c16_i32 = arith.constant 16 : i32
    %0 = arith.muli %arg1, %c16_i32 : i32
    %c0 = arith.constant 0 : index
    %c0_0 = arith.constant 0 : index
    %c0_1 = arith.constant 0 : index
    %1 = vector.load %arg2[%c0, %c0_0, %c0_1] : memref<1x16x128xf32, #tpu.memory_space<vmem>>, vector<1x16x128xf32>
    %2 = vector.shape_cast %1 : vector<1x16x128xf32> to vector<16x128xf32>
    %c0_2 = arith.constant 0 : index
    %c0_3 = arith.constant 0 : index
    %c0_4 = arith.constant 0 : index
    %3 = vector.load %arg3[%c0_2, %c0_3, %c0_4] : memref<1x16x128xf32, #tpu.memory_space<vmem>>, vector<1x16x128xf32>
    %4 = vector.shape_cast %3 : vector<1x16x128xf32> to vector<16x128xf32>
    %c0_5 = arith.constant 0 : index
    %c0_6 = arith.constant 0 : index
    %c0_7 = arith.constant 0 : index
    %5 = vector.load %arg4[%c0_5, %c0_6, %c0_7] : memref<1x16x128xf32, #tpu.memory_space<vmem>>, vector<1x16x128xf32>
    %6 = vector.shape_cast %5 : vector<1x16x128xf32> to vector<16x128xf32>
    %c0_8 = arith.constant 0 : index
    %c0_9 = arith.constant 0 : index
    %c0_10 = arith.constant 0 : index
    %7 = vector.load %arg5[%c0_8, %c0_9, %c0_10] : memref<1x16x128xf32, #tpu.memory_space<vmem>>, vector<1x16x128xf32>
    %8 = vector.shape_cast %7 : vector<1x16x128xf32> to vector<16x128xf32>
    %c0_11 = arith.constant 0 : index
    %c0_12 = arith.constant 0 : index
    %c0_13 = arith.constant 0 : index
    %9 = vector.load %arg6[%c0_11, %c0_12, %c0_13] : memref<1x16x128xf32, #tpu.memory_space<vmem>>, vector<1x16x128xf32>
    %10 = vector.shape_cast %9 : vector<1x16x128xf32> to vector<16x128xf32>
    %c0_14 = arith.constant 0 : index
    %c0_15 = arith.constant 0 : index
    %c0_16 = arith.constant 0 : index
    %11 = vector.load %arg7[%c0_14, %c0_15, %c0_16] : memref<1x16x128xf32, #tpu.memory_space<vmem>>, vector<1x16x128xf32>
    %12 = vector.shape_cast %11 : vector<1x16x128xf32> to vector<16x128xf32>
    %c0_17 = arith.constant 0 : index
    %c0_18 = arith.constant 0 : index
    %c0_19 = arith.constant 0 : index
    %13 = vector.load %arg8[%c0_17, %c0_18, %c0_19] : memref<1x16x128xf32, #tpu.memory_space<vmem>>, vector<1x16x128xf32>
    %14 = vector.shape_cast %13 : vector<1x16x128xf32> to vector<16x128xf32>
    %15 = tpu.iota {dimensions = array<i32: 0>} : vector<16x128xi32>
    %16 = vector.broadcast %0 : i32 to vector<16x128xi32>
    %17 = arith.addi %16, %15 : vector<16x128xi32>
    %18 = tpu.iota {dimensions = array<i32: 1>} : vector<16x128xi32>
    %c14_i32 = arith.constant 14 : i32
    %19 = vector.broadcast %c14_i32 : i32 to vector<16x128xi32>
    %20 = arith.cmpi slt, %17, %19 : vector<16x128xi32>
    %c126_i32 = arith.constant 126 : i32
    %21 = vector.broadcast %c126_i32 : i32 to vector<16x128xi32>
    %22 = arith.cmpi slt, %18, %21 : vector<16x128xi32>
    %23 = arith.andi %20, %22 : vector<16x128xi1>
    %c0_20 = arith.constant 0 : index
    %c0_21 = arith.constant 0 : index
    %c0_22 = arith.constant 0 : index
    %24 = vector.load %arg13[%c0_20, %c0_21, %c0_22] : memref<1x8x128xf32, #tpu.memory_space<vmem>>, vector<1x8x128xf32>
    %25 = vector.shape_cast %24 : vector<1x8x128xf32> to vector<8x128xf32>
    %26 = tpu.concatenate %10, %25 in 0 : vector<16x128xf32>, vector<8x128xf32> -> vector<24x128xf32>
    %27 = vector.extract_strided_slice %26 {offsets = [1, 0], sizes = [16, 128], strides = [1, 1]} : vector<24x128xf32> to vector<16x128xf32>
    %28 = vector.extract_strided_slice %26 {offsets = [2, 0], sizes = [16, 128], strides = [1, 1]} : vector<24x128xf32> to vector<16x128xf32>
    %c126_i32_23 = arith.constant 126 : i32
    %29 = tpu.dynamic_rotate %27 by %c126_i32_23 dim 1 : vector<16x128xf32>, i32 -> vector<16x128xf32>
    %30 = arith.subf %27, %29 : vector<16x128xf32>
    %31 = arith.subf %10, %28 : vector<16x128xf32>
    %c127_i32 = arith.constant 127 : i32
    %32 = tpu.dynamic_rotate %31 by %c127_i32 dim 1 : vector<16x128xf32>, i32 -> vector<16x128xf32>
    %33 = arith.mulf %30, %30 : vector<16x128xf32>
    %34 = arith.mulf %32, %32 : vector<16x128xf32>
    %35 = arith.addf %33, %34 : vector<16x128xf32>
    %36 = math.sqrt %35 : vector<16x128xf32>
    %cst = arith.constant 1.000000e+00 : f32
    %37 = vector.broadcast %cst : f32 to vector<16x128xf32>
    %38 = arith.subf %37, %10 : vector<16x128xf32>
    %cst_24 = arith.constant 5.000000e-01 : f32
    %39 = vector.broadcast %cst_24 : f32 to vector<16x128xf32>
    %40 = arith.cmpf ogt, %10, %39 : vector<16x128xf32>
    %cst_25 = arith.constant 1.000000e+00 : f32
    %41 = vector.broadcast %cst_25 : f32 to vector<16x128xf32>
    %42 = arith.subf %41, %2 : vector<16x128xf32>
    %cst_26 = arith.constant 1.000000e+00 : f32
    %43 = vector.broadcast %cst_26 : f32 to vector<16x128xf32>
    %44 = arith.subf %43, %4 : vector<16x128xf32>
    %cst_27 = arith.constant 1.000000e+00 : f32
    %45 = vector.broadcast %cst_27 : f32 to vector<16x128xf32>
    %46 = arith.subf %45, %6 : vector<16x128xf32>
    %cst_28 = arith.constant 1.000000e+00 : f32
    %47 = vector.broadcast %cst_28 : f32 to vector<16x128xf32>
    %48 = arith.subf %47, %8 : vector<16x128xf32>
    %49 = arith.select %40, %2, %42 : vector<16x128xi1>, vector<16x128xf32>
    %50 = math.log %49 : vector<16x128xf32>
    %cst_29 = arith.constant -1.000000e+02 : f32
    %51 = vector.broadcast %cst_29 : f32 to vector<16x128xf32>
    %52 = arith.maximumf %50, %51 : vector<16x128xf32>
    %cst_30 = arith.constant 0.000000e+00 : f32
    %53 = vector.broadcast %cst_30 : f32 to vector<16x128xf32>
    %54 = arith.subf %53, %52 : vector<16x128xf32>
    %cst_31 = arith.constant dense<0.000000e+00> : vector<128xf32>
    %55 = vector.multi_reduction <add>, %54, %cst_31 [0] : vector<16x128xf32> to vector<128xf32>
    %56 = vector.shape_cast %55 : vector<128xf32> to vector<1x128xf32>
    %c0_32 = arith.constant 0 : index
    %c0_33 = arith.constant 0 : index
    %c0_34 = arith.constant 0 : index
    %57 = vector.load %arg9[%c0_32, %c0_33, %c0_34] : memref<1x8x128xf32, #tpu.memory_space<vmem>>, vector<1x8x128xf32>
    %58 = vector.shape_cast %57 : vector<1x8x128xf32> to vector<8x128xf32>
    %59 = tpu.concatenate %2, %58 in 0 : vector<16x128xf32>, vector<8x128xf32> -> vector<24x128xf32>
    %60 = vector.extract_strided_slice %59 {offsets = [1, 0], sizes = [16, 128], strides = [1, 1]} : vector<24x128xf32> to vector<16x128xf32>
    %61 = vector.extract_strided_slice %59 {offsets = [2, 0], sizes = [16, 128], strides = [1, 1]} : vector<24x128xf32> to vector<16x128xf32>
    %c126_i32_35 = arith.constant 126 : i32
    %62 = tpu.dynamic_rotate %60 by %c126_i32_35 dim 1 : vector<16x128xf32>, i32 -> vector<16x128xf32>
    %63 = arith.subf %60, %62 : vector<16x128xf32>
    %64 = arith.subf %2, %61 : vector<16x128xf32>
    %c127_i32_36 = arith.constant 127 : i32
    %65 = tpu.dynamic_rotate %64 by %c127_i32_36 dim 1 : vector<16x128xf32>, i32 -> vector<16x128xf32>
    %66 = arith.mulf %63, %63 : vector<16x128xf32>
    %67 = arith.mulf %65, %65 : vector<16x128xf32>
    %68 = arith.addf %66, %67 : vector<16x128xf32>
    %69 = math.sqrt %68 : vector<16x128xf32>
    %70 = arith.subf %69, %36 : vector<16x128xf32>
    %71 = math.absf %70 : vector<16x128xf32>
    %cst_37 = arith.constant 1.000000e+00 : f32
    %72 = vector.broadcast %cst_37 : f32 to vector<16x128xf32>
    %73 = arith.cmpf olt, %71, %72 : vector<16x128xf32>
    %cst_38 = arith.constant 5.000000e-01 : f32
    %74 = vector.broadcast %cst_38 : f32 to vector<16x128xf32>
    %75 = arith.mulf %74, %70 : vector<16x128xf32>
    %76 = arith.mulf %75, %70 : vector<16x128xf32>
    %cst_39 = arith.constant 5.000000e-01 : f32
    %77 = vector.broadcast %cst_39 : f32 to vector<16x128xf32>
    %78 = arith.subf %71, %77 : vector<16x128xf32>
    %79 = arith.select %73, %76, %78 : vector<16x128xi1>, vector<16x128xf32>
    %cst_40 = arith.constant 0.000000e+00 : f32
    %80 = vector.broadcast %cst_40 : f32 to vector<16x128xf32>
    %81 = arith.select %23, %79, %80 : vector<16x128xi1>, vector<16x128xf32>
    %cst_41 = arith.constant dense<0.000000e+00> : vector<128xf32>
    %82 = vector.multi_reduction <add>, %81, %cst_41 [0] : vector<16x128xf32> to vector<128xf32>
    %83 = vector.shape_cast %82 : vector<128xf32> to vector<1x128xf32>
    %84 = arith.select %40, %4, %44 : vector<16x128xi1>, vector<16x128xf32>
    %85 = math.log %84 : vector<16x128xf32>
    %cst_42 = arith.constant -1.000000e+02 : f32
    %86 = vector.broadcast %cst_42 : f32 to vector<16x128xf32>
    %87 = arith.maximumf %85, %86 : vector<16x128xf32>
    %cst_43 = arith.constant 0.000000e+00 : f32
    %88 = vector.broadcast %cst_43 : f32 to vector<16x128xf32>
    %89 = arith.subf %88, %87 : vector<16x128xf32>
    %cst_44 = arith.constant dense<0.000000e+00> : vector<128xf32>
    %90 = vector.multi_reduction <add>, %89, %cst_44 [0] : vector<16x128xf32> to vector<128xf32>
    %91 = vector.shape_cast %90 : vector<128xf32> to vector<1x128xf32>
    %c0_45 = arith.constant 0 : index
    %c0_46 = arith.constant 0 : index
    %c0_47 = arith.constant 0 : index
    %92 = vector.load %arg10[%c0_45, %c0_46, %c0_47] : memref<1x8x128xf32, #tpu.memory_space<vmem>>, vector<1x8x128xf32>
    %93 = vector.shape_cast %92 : vector<1x8x128xf32> to vector<8x128xf32>
    %94 = tpu.concatenate %4, %93 in 0 : vector<16x128xf32>, vector<8x128xf32> -> vector<24x128xf32>
    %95 = vector.extract_strided_slice %94 {offsets = [1, 0], sizes = [16, 128], strides = [1, 1]} : vector<24x128xf32> to vector<16x128xf32>
    %96 = vector.extract_strided_slice %94 {offsets = [2, 0], sizes = [16, 128], strides = [1, 1]} : vector<24x128xf32> to vector<16x128xf32>
    %c126_i32_48 = arith.constant 126 : i32
    %97 = tpu.dynamic_rotate %95 by %c126_i32_48 dim 1 : vector<16x128xf32>, i32 -> vector<16x128xf32>
    %98 = arith.subf %95, %97 : vector<16x128xf32>
    %99 = arith.subf %4, %96 : vector<16x128xf32>
    %c127_i32_49 = arith.constant 127 : i32
    %100 = tpu.dynamic_rotate %99 by %c127_i32_49 dim 1 : vector<16x128xf32>, i32 -> vector<16x128xf32>
    %101 = arith.mulf %98, %98 : vector<16x128xf32>
    %102 = arith.mulf %100, %100 : vector<16x128xf32>
    %103 = arith.addf %101, %102 : vector<16x128xf32>
    %104 = math.sqrt %103 : vector<16x128xf32>
    %105 = arith.subf %104, %36 : vector<16x128xf32>
    %106 = math.absf %105 : vector<16x128xf32>
    %cst_50 = arith.constant 1.000000e+00 : f32
    %107 = vector.broadcast %cst_50 : f32 to vector<16x128xf32>
    %108 = arith.cmpf olt, %106, %107 : vector<16x128xf32>
    %cst_51 = arith.constant 5.000000e-01 : f32
    %109 = vector.broadcast %cst_51 : f32 to vector<16x128xf32>
    %110 = arith.mulf %109, %105 : vector<16x128xf32>
    %111 = arith.mulf %110, %105 : vector<16x128xf32>
    %cst_52 = arith.constant 5.000000e-01 : f32
    %112 = vector.broadcast %cst_52 : f32 to vector<16x128xf32>
    %113 = arith.subf %106, %112 : vector<16x128xf32>
    %114 = arith.select %108, %111, %113 : vector<16x128xi1>, vector<16x128xf32>
    %cst_53 = arith.constant 0.000000e+00 : f32
    %115 = vector.broadcast %cst_53 : f32 to vector<16x128xf32>
    %116 = arith.select %23, %114, %115 : vector<16x128xi1>, vector<16x128xf32>
    %cst_54 = arith.constant dense<0.000000e+00> : vector<128xf32>
    %117 = vector.multi_reduction <add>, %116, %cst_54 [0] : vector<16x128xf32> to vector<128xf32>
    %118 = vector.shape_cast %117 : vector<128xf32> to vector<1x128xf32>
    %119 = arith.select %40, %6, %46 : vector<16x128xi1>, vector<16x128xf32>
    %120 = math.log %119 : vector<16x128xf32>
    %cst_55 = arith.constant -1.000000e+02 : f32
    %121 = vector.broadcast %cst_55 : f32 to vector<16x128xf32>
    %122 = arith.maximumf %120, %121 : vector<16x128xf32>
    %cst_56 = arith.constant 0.000000e+00 : f32
    %123 = vector.broadcast %cst_56 : f32 to vector<16x128xf32>
    %124 = arith.subf %123, %122 : vector<16x128xf32>
    %cst_57 = arith.constant dense<0.000000e+00> : vector<128xf32>
    %125 = vector.multi_reduction <add>, %124, %cst_57 [0] : vector<16x128xf32> to vector<128xf32>
    %126 = vector.shape_cast %125 : vector<128xf32> to vector<1x128xf32>
    %c0_58 = arith.constant 0 : index
    %c0_59 = arith.constant 0 : index
    %c0_60 = arith.constant 0 : index
    %127 = vector.load %arg11[%c0_58, %c0_59, %c0_60] : memref<1x8x128xf32, #tpu.memory_space<vmem>>, vector<1x8x128xf32>
    %128 = vector.shape_cast %127 : vector<1x8x128xf32> to vector<8x128xf32>
    %129 = tpu.concatenate %6, %128 in 0 : vector<16x128xf32>, vector<8x128xf32> -> vector<24x128xf32>
    %130 = vector.extract_strided_slice %129 {offsets = [1, 0], sizes = [16, 128], strides = [1, 1]} : vector<24x128xf32> to vector<16x128xf32>
    %131 = vector.extract_strided_slice %129 {offsets = [2, 0], sizes = [16, 128], strides = [1, 1]} : vector<24x128xf32> to vector<16x128xf32>
    %c126_i32_61 = arith.constant 126 : i32
    %132 = tpu.dynamic_rotate %130 by %c126_i32_61 dim 1 : vector<16x128xf32>, i32 -> vector<16x128xf32>
    %133 = arith.subf %130, %132 : vector<16x128xf32>
    %134 = arith.subf %6, %131 : vector<16x128xf32>
    %c127_i32_62 = arith.constant 127 : i32
    %135 = tpu.dynamic_rotate %134 by %c127_i32_62 dim 1 : vector<16x128xf32>, i32 -> vector<16x128xf32>
    %136 = arith.mulf %133, %133 : vector<16x128xf32>
    %137 = arith.mulf %135, %135 : vector<16x128xf32>
    %138 = arith.addf %136, %137 : vector<16x128xf32>
    %139 = math.sqrt %138 : vector<16x128xf32>
    %140 = arith.subf %139, %36 : vector<16x128xf32>
    %141 = math.absf %140 : vector<16x128xf32>
    %cst_63 = arith.constant 1.000000e+00 : f32
    %142 = vector.broadcast %cst_63 : f32 to vector<16x128xf32>
    %143 = arith.cmpf olt, %141, %142 : vector<16x128xf32>
    %cst_64 = arith.constant 5.000000e-01 : f32
    %144 = vector.broadcast %cst_64 : f32 to vector<16x128xf32>
    %145 = arith.mulf %144, %140 : vector<16x128xf32>
    %146 = arith.mulf %145, %140 : vector<16x128xf32>
    %cst_65 = arith.constant 5.000000e-01 : f32
    %147 = vector.broadcast %cst_65 : f32 to vector<16x128xf32>
    %148 = arith.subf %141, %147 : vector<16x128xf32>
    %149 = arith.select %143, %146, %148 : vector<16x128xi1>, vector<16x128xf32>
    %cst_66 = arith.constant 0.000000e+00 : f32
    %150 = vector.broadcast %cst_66 : f32 to vector<16x128xf32>
    %151 = arith.select %23, %149, %150 : vector<16x128xi1>, vector<16x128xf32>
    %cst_67 = arith.constant dense<0.000000e+00> : vector<128xf32>
    %152 = vector.multi_reduction <add>, %151, %cst_67 [0] : vector<16x128xf32> to vector<128xf32>
    %153 = vector.shape_cast %152 : vector<128xf32> to vector<1x128xf32>
    %154 = arith.select %40, %8, %48 : vector<16x128xi1>, vector<16x128xf32>
    %155 = math.log %154 : vector<16x128xf32>
    %cst_68 = arith.constant -1.000000e+02 : f32
    %156 = vector.broadcast %cst_68 : f32 to vector<16x128xf32>
    %157 = arith.maximumf %155, %156 : vector<16x128xf32>
    %cst_69 = arith.constant 0.000000e+00 : f32
    %158 = vector.broadcast %cst_69 : f32 to vector<16x128xf32>
    %159 = arith.subf %158, %157 : vector<16x128xf32>
    %cst_70 = arith.constant dense<0.000000e+00> : vector<128xf32>
    %160 = vector.multi_reduction <add>, %159, %cst_70 [0] : vector<16x128xf32> to vector<128xf32>
    %161 = vector.shape_cast %160 : vector<128xf32> to vector<1x128xf32>
    %c0_71 = arith.constant 0 : index
    %c0_72 = arith.constant 0 : index
    %c0_73 = arith.constant 0 : index
    %162 = vector.load %arg12[%c0_71, %c0_72, %c0_73] : memref<1x8x128xf32, #tpu.memory_space<vmem>>, vector<1x8x128xf32>
    %163 = vector.shape_cast %162 : vector<1x8x128xf32> to vector<8x128xf32>
    %164 = tpu.concatenate %8, %163 in 0 : vector<16x128xf32>, vector<8x128xf32> -> vector<24x128xf32>
    %165 = vector.extract_strided_slice %164 {offsets = [1, 0], sizes = [16, 128], strides = [1, 1]} : vector<24x128xf32> to vector<16x128xf32>
    %166 = vector.extract_strided_slice %164 {offsets = [2, 0], sizes = [16, 128], strides = [1, 1]} : vector<24x128xf32> to vector<16x128xf32>
    %c126_i32_74 = arith.constant 126 : i32
    %167 = tpu.dynamic_rotate %165 by %c126_i32_74 dim 1 : vector<16x128xf32>, i32 -> vector<16x128xf32>
    %168 = arith.subf %165, %167 : vector<16x128xf32>
    %169 = arith.subf %8, %166 : vector<16x128xf32>
    %c127_i32_75 = arith.constant 127 : i32
    %170 = tpu.dynamic_rotate %169 by %c127_i32_75 dim 1 : vector<16x128xf32>, i32 -> vector<16x128xf32>
    %171 = arith.mulf %168, %168 : vector<16x128xf32>
    %172 = arith.mulf %170, %170 : vector<16x128xf32>
    %173 = arith.addf %171, %172 : vector<16x128xf32>
    %174 = math.sqrt %173 : vector<16x128xf32>
    %175 = arith.subf %174, %36 : vector<16x128xf32>
    %176 = math.absf %175 : vector<16x128xf32>
    %cst_76 = arith.constant 1.000000e+00 : f32
    %177 = vector.broadcast %cst_76 : f32 to vector<16x128xf32>
    %178 = arith.cmpf olt, %176, %177 : vector<16x128xf32>
    %cst_77 = arith.constant 5.000000e-01 : f32
    %179 = vector.broadcast %cst_77 : f32 to vector<16x128xf32>
    %180 = arith.mulf %179, %175 : vector<16x128xf32>
    %181 = arith.mulf %180, %175 : vector<16x128xf32>
    %cst_78 = arith.constant 5.000000e-01 : f32
    %182 = vector.broadcast %cst_78 : f32 to vector<16x128xf32>
    %183 = arith.subf %176, %182 : vector<16x128xf32>
    %184 = arith.select %178, %181, %183 : vector<16x128xi1>, vector<16x128xf32>
    %cst_79 = arith.constant 0.000000e+00 : f32
    %185 = vector.broadcast %cst_79 : f32 to vector<16x128xf32>
    %186 = arith.select %23, %184, %185 : vector<16x128xi1>, vector<16x128xf32>
    %cst_80 = arith.constant dense<0.000000e+00> : vector<128xf32>
    %187 = vector.multi_reduction <add>, %186, %cst_80 [0] : vector<16x128xf32> to vector<128xf32>
    %188 = vector.shape_cast %187 : vector<128xf32> to vector<1x128xf32>
    %189 = arith.mulf %4, %10 : vector<16x128xf32>
    %190 = arith.mulf %44, %38 : vector<16x128xf32>
    %191 = arith.addf %189, %190 : vector<16x128xf32>
    %cst_81 = arith.constant 0.000000e+00 : f32
    %cst_82 = arith.constant 1.000000e+00 : f32
    %192 = vector.broadcast %cst_81 : f32 to vector<16x128xf32>
    %193 = arith.maximumf %192, %191 : vector<16x128xf32>
    %194 = vector.broadcast %cst_82 : f32 to vector<16x128xf32>
    %195 = arith.minimumf %194, %193 : vector<16x128xf32>
    %cst_83 = arith.constant 1.000000e+00 : f32
    %196 = vector.broadcast %cst_83 : f32 to vector<16x128xf32>
    %197 = arith.subf %196, %195 : vector<16x128xf32>
    %198 = arith.mulf %6, %10 : vector<16x128xf32>
    %199 = arith.mulf %46, %38 : vector<16x128xf32>
    %200 = arith.addf %198, %199 : vector<16x128xf32>
    %201 = arith.mulf %197, %200 : vector<16x128xf32>
    %cst_84 = arith.constant 0.000000e+00 : f32
    %cst_85 = arith.constant 1.000000e+00 : f32
    %202 = vector.broadcast %cst_84 : f32 to vector<16x128xf32>
    %203 = arith.maximumf %202, %201 : vector<16x128xf32>
    %204 = vector.broadcast %cst_85 : f32 to vector<16x128xf32>
    %205 = arith.minimumf %204, %203 : vector<16x128xf32>
    %cst_86 = arith.constant 1.000000e+00 : f32
    %206 = vector.broadcast %cst_86 : f32 to vector<16x128xf32>
    %207 = arith.subf %206, %12 : vector<16x128xf32>
    %cst_87 = arith.constant 1.000000e+00 : f32
    %208 = vector.broadcast %cst_87 : f32 to vector<16x128xf32>
    %209 = arith.subf %208, %195 : vector<16x128xf32>
    %210 = math.log %12 : vector<16x128xf32>
    %cst_88 = arith.constant -1.000000e+02 : f32
    %211 = vector.broadcast %cst_88 : f32 to vector<16x128xf32>
    %212 = arith.maximumf %210, %211 : vector<16x128xf32>
    %213 = arith.mulf %195, %212 : vector<16x128xf32>
    %214 = math.log %207 : vector<16x128xf32>
    %cst_89 = arith.constant -1.000000e+02 : f32
    %215 = vector.broadcast %cst_89 : f32 to vector<16x128xf32>
    %216 = arith.maximumf %214, %215 : vector<16x128xf32>
    %217 = arith.mulf %209, %216 : vector<16x128xf32>
    %218 = arith.addf %213, %217 : vector<16x128xf32>
    %cst_90 = arith.constant 0.000000e+00 : f32
    %219 = vector.broadcast %cst_90 : f32 to vector<16x128xf32>
    %220 = arith.subf %219, %218 : vector<16x128xf32>
    %cst_91 = arith.constant dense<0.000000e+00> : vector<128xf32>
    %221 = vector.multi_reduction <add>, %220, %cst_91 [0] : vector<16x128xf32> to vector<128xf32>
    %222 = vector.shape_cast %221 : vector<128xf32> to vector<1x128xf32>
    %cst_92 = arith.constant 1.000000e+00 : f32
    %223 = vector.broadcast %cst_92 : f32 to vector<16x128xf32>
    %224 = arith.subf %223, %14 : vector<16x128xf32>
    %cst_93 = arith.constant 1.000000e+00 : f32
    %225 = vector.broadcast %cst_93 : f32 to vector<16x128xf32>
    %226 = arith.subf %225, %205 : vector<16x128xf32>
    %227 = math.log %14 : vector<16x128xf32>
    %cst_94 = arith.constant -1.000000e+02 : f32
    %228 = vector.broadcast %cst_94 : f32 to vector<16x128xf32>
    %229 = arith.maximumf %227, %228 : vector<16x128xf32>
    %230 = arith.mulf %205, %229 : vector<16x128xf32>
    %231 = math.log %224 : vector<16x128xf32>
    %cst_95 = arith.constant -1.000000e+02 : f32
    %232 = vector.broadcast %cst_95 : f32 to vector<16x128xf32>
    %233 = arith.maximumf %231, %232 : vector<16x128xf32>
    %234 = arith.mulf %226, %233 : vector<16x128xf32>
    %235 = arith.addf %230, %234 : vector<16x128xf32>
    %cst_96 = arith.constant 0.000000e+00 : f32
    %236 = vector.broadcast %cst_96 : f32 to vector<16x128xf32>
    %237 = arith.subf %236, %235 : vector<16x128xf32>
    %cst_97 = arith.constant dense<0.000000e+00> : vector<128xf32>
    %238 = vector.multi_reduction <add>, %237, %cst_97 [0] : vector<16x128xf32> to vector<128xf32>
    %239 = vector.shape_cast %238 : vector<128xf32> to vector<1x128xf32>
    %cst_98 = arith.constant 0.000000e+00 : f32
    %240 = vector.broadcast %cst_98 : f32 to vector<6x128xf32>
    %241 = tpu.concatenate %56, %83, %91, %118, %126, %153, %161, %188, %222, %239, %240 in 0 : vector<1x128xf32>, vector<1x128xf32>, vector<1x128xf32>, vector<1x128xf32>, vector<1x128xf32>, vector<1x128xf32>, vector<1x128xf32>, vector<1x128xf32>, vector<1x128xf32>, vector<1x128xf32>, vector<6x128xf32> -> vector<16x128xf32>
    %c0_99 = arith.constant 0 : index
    %c0_100 = arith.constant 0 : index
    %c0_101 = arith.constant 0 : index
    %c0_102 = arith.constant 0 : index
    %242 = vector.load %arg14[%c0_99, %c0_100, %c0_101, %c0_102] : memref<1x1x16x128xf32, #tpu.memory_space<vmem>>, vector<1x1x16x128xf32>
    %243 = vector.shape_cast %242 : vector<1x1x16x128xf32> to vector<16x128xf32>
    %244 = vector.shape_cast %241 : vector<16x128xf32> to vector<1x1x16x128xf32>
    tpu.vector_store %arg14[%c0_99, %c0_100, %c0_101, %c0_102], %244 {strides = array<i32>} : memref<1x1x16x128xf32, #tpu.memory_space<vmem>>, vector<1x1x16x128xf32>,
    return
  }
  func.func @transform_0(%arg0: i32, %arg1: i32) -> (i32, i32, i32) {
    %c0_i32 = arith.constant 0 : i32
    %c0_i32_0 = arith.constant 0 : i32
    return %arg0, %arg1, %c0_i32 : i32, i32, i32
  }
  func.func @transform_1(%arg0: i32, %arg1: i32) -> (i32, i32, i32) {
    %c0_i32 = arith.constant 0 : i32
    %c0_i32_0 = arith.constant 0 : i32
    return %arg0, %arg1, %c0_i32 : i32, i32, i32
  }
  func.func @transform_2(%arg0: i32, %arg1: i32) -> (i32, i32, i32) {
    %c0_i32 = arith.constant 0 : i32
    %c0_i32_0 = arith.constant 0 : i32
    return %arg0, %arg1, %c0_i32 : i32, i32, i32
  }
  func.func @transform_3(%arg0: i32, %arg1: i32) -> (i32, i32, i32) {
    %c0_i32 = arith.constant 0 : i32
    %c0_i32_0 = arith.constant 0 : i32
    return %arg0, %arg1, %c0_i32 : i32, i32, i32
  }
  func.func @transform_4(%arg0: i32, %arg1: i32) -> (i32, i32, i32) {
    %c0_i32 = arith.constant 0 : i32
    %c0_i32_0 = arith.constant 0 : i32
    return %arg0, %arg1, %c0_i32 : i32, i32, i32
  }
  func.func @transform_5(%arg0: i32, %arg1: i32) -> (i32, i32, i32) {
    %c0_i32 = arith.constant 0 : i32
    %c0_i32_0 = arith.constant 0 : i32
    return %arg0, %arg1, %c0_i32 : i32, i32, i32
  }
  func.func @transform_6(%arg0: i32, %arg1: i32) -> (i32, i32, i32) {
    %c0_i32 = arith.constant 0 : i32
    %c0_i32_0 = arith.constant 0 : i32
    return %arg0, %arg1, %c0_i32 : i32, i32, i32
  }
  func.func @transform_7(%arg0: i32, %arg1: i32) -> (i32, i32, i32) {
    %c1_i32 = arith.constant 1 : i32
    %0 = arith.addi %arg1, %c1_i32 : i32
    %c2_i32 = arith.constant 2 : i32
    %1 = arith.muli %0, %c2_i32 : i32
    %c1_i32_0 = arith.constant 1 : i32
    %2 = arith.minsi %1, %c1_i32_0 : i32
    %c0_i32 = arith.constant 0 : i32
    %c0_i32_1 = arith.constant 0 : i32
    return %arg0, %2, %c0_i32 : i32, i32, i32
  }
  func.func @transform_8(%arg0: i32, %arg1: i32) -> (i32, i32, i32) {
    %c1_i32 = arith.constant 1 : i32
    %0 = arith.addi %arg1, %c1_i32 : i32
    %c2_i32 = arith.constant 2 : i32
    %1 = arith.muli %0, %c2_i32 : i32
    %c1_i32_0 = arith.constant 1 : i32
    %2 = arith.minsi %1, %c1_i32_0 : i32
    %c0_i32 = arith.constant 0 : i32
    %c0_i32_1 = arith.constant 0 : i32
    return %arg0, %2, %c0_i32 : i32, i32, i32
  }
  func.func @transform_9(%arg0: i32, %arg1: i32) -> (i32, i32, i32) {
    %c1_i32 = arith.constant 1 : i32
    %0 = arith.addi %arg1, %c1_i32 : i32
    %c2_i32 = arith.constant 2 : i32
    %1 = arith.muli %0, %c2_i32 : i32
    %c1_i32_0 = arith.constant 1 : i32
    %2 = arith.minsi %1, %c1_i32_0 : i32
    %c0_i32 = arith.constant 0 : i32
    %c0_i32_1 = arith.constant 0 : i32
    return %arg0, %2, %c0_i32 : i32, i32, i32
  }
  func.func @transform_10(%arg0: i32, %arg1: i32) -> (i32, i32, i32) {
    %c1_i32 = arith.constant 1 : i32
    %0 = arith.addi %arg1, %c1_i32 : i32
    %c2_i32 = arith.constant 2 : i32
    %1 = arith.muli %0, %c2_i32 : i32
    %c1_i32_0 = arith.constant 1 : i32
    %2 = arith.minsi %1, %c1_i32_0 : i32
    %c0_i32 = arith.constant 0 : i32
    %c0_i32_1 = arith.constant 0 : i32
    return %arg0, %2, %c0_i32 : i32, i32, i32
  }
  func.func @transform_11(%arg0: i32, %arg1: i32) -> (i32, i32, i32) {
    %c1_i32 = arith.constant 1 : i32
    %0 = arith.addi %arg1, %c1_i32 : i32
    %c2_i32 = arith.constant 2 : i32
    %1 = arith.muli %0, %c2_i32 : i32
    %c1_i32_0 = arith.constant 1 : i32
    %2 = arith.minsi %1, %c1_i32_0 : i32
    %c0_i32 = arith.constant 0 : i32
    %c0_i32_1 = arith.constant 0 : i32
    return %arg0, %2, %c0_i32 : i32, i32, i32
  }
  func.func @transform_12(%arg0: i32, %arg1: i32) -> (i32, i32, i32, i32) {
    %c0_i32 = arith.constant 0 : i32
    %c0_i32_0 = arith.constant 0 : i32
    %c0_i32_1 = arith.constant 0 : i32
    return %arg0, %arg1, %c0_i32, %c0_i32_0 : i32, i32, i32, i32
  }
}

</mosaic_0001>

<llo_original>
// kernel: head_aux_fuse_loss_for_14_5.1
$region0: #{head_aux_fuse_loss_for_14_5.1}
  #allocation0 [shape = 'u32[]', space=smem, size = 0x4, offset = 0x4, fixed_abs, tag = 'smem constant byte address 0x4 - core index']
  #allocation1 [shape = 'u32[144,128]{1,0:T(1,128)}', space=vmem, size = 0x12000, scoped, tag = 'internal scratch']
  %s0 = inlined_call_operand.vmem [shape: f32[2,16,128], index: 0, kind: input, shape index: {}, may-alias: {0,7}]
  %s1 = inlined_call_operand.vmem [shape: f32[2,16,128], index: 1, kind: input, shape index: {}, may-alias: {1,8}]
  %s2 = inlined_call_operand.vmem [shape: f32[2,16,128], index: 2, kind: input, shape index: {}, may-alias: {2,9}]
  %s3 = inlined_call_operand.vmem [shape: f32[2,16,128], index: 3, kind: input, shape index: {}, may-alias: {3,10}]
  %s4 = inlined_call_operand.vmem [shape: f32[2,16,128], index: 4, kind: input, shape index: {}, may-alias: {4,11}]
  %s5 = inlined_call_operand.vmem [shape: f32[2,16,128], index: 5, kind: input, shape index: {}]
  %s6 = inlined_call_operand.vmem [shape: f32[2,16,128], index: 6, kind: input, shape index: {}]
  %s7 = inlined_call_operand.vmem [shape: f32[2,16,128], index: 7, kind: input, shape index: {}, may-alias: {0,7}]
  %s8 = inlined_call_operand.vmem [shape: f32[2,16,128], index: 8, kind: input, shape index: {}, may-alias: {1,8}]
  %s9 = inlined_call_operand.vmem [shape: f32[2,16,128], index: 9, kind: input, shape index: {}, may-alias: {2,9}]
  %s10 = inlined_call_operand.vmem [shape: f32[2,16,128], index: 10, kind: input, shape index: {}, may-alias: {3,10}]
  %s11 = inlined_call_operand.vmem [shape: f32[2,16,128], index: 11, kind: input, shape index: {}, may-alias: {4,11}]
  %s12 = inlined_call_operand.vmem [shape: f32[2,1,16,128], index: 12, kind: output, shape index: {}]
  %s13 = sld [smem:[#allocation0]]
  $region81: #{head_aux_fuse_loss_for_14_5.1} parent=0
    _
  %s15 = ssub.s32 1, %s13
  %s16 = scalar_select 0, %s15, %s13
  loop: start=0, step=1, limit=4
  $region2: #{head_aux_fuse_loss_for_14_5.1} parent=0 // loop_pre_header
    _
  $region3: #{head_aux_fuse_loss_for_14_5.1} parent=0 // loop_header
    %s18 = sphi 0, %s22
    %p19 = scmp.ge.s32.totalorder %s18, 4
    %s25 = sphi 0, %s37
    %s26 = sphi 0, %s33
    %s27 = sphi 0, %s25
    %s28 = sphi 0, %s26
    %s29 = sphi 0, %s27
    %s30 = sphi 0, %s28
    %s42 = sphi 0, %s44
    %s45 = sphi 0, %s42
    %s46 = sphi 0, %s45
    %s62 = sphi 0, %s46
    %s70 = sphi 0, %s72
    %s73 = sphi 0, %s70
    %s74 = sphi 0, %s73
    %s90 = sphi 0, %s74
    %s98 = sphi 0, %s100
    %s101 = sphi 0, %s98
    %s102 = sphi 0, %s101
    %s118 = sphi 0, %s102
    %s126 = sphi 0, %s128
    %s129 = sphi 0, %s126
    %s130 = sphi 0, %s129
    %s146 = sphi 0, %s130
    %s154 = sphi 0, %s156
    %s157 = sphi 0, %s154
    %s158 = sphi 0, %s157
    %s174 = sphi 0, %s158
    %s182 = sphi 0, %s184
    %s185 = sphi 0, %s182
    %s186 = sphi 0, %s185
    %s202 = sphi 0, %s186
    %s210 = sphi 0, %s212
    %s213 = sphi 0, %s210
    %s214 = sphi 0, %s213
    %s230 = sphi 0, %s214
    %s246 = sphi 0, %s248
    %s249 = sphi 0, %s246
    %s250 = sphi 0, %s249
    %s266 = sphi 0, %s250
    %s282 = sphi 0, %s284
    %s285 = sphi 0, %s282
    %s286 = sphi 0, %s285
    %s302 = sphi 0, %s286
    %s318 = sphi 0, %s320
    %s321 = sphi 0, %s318
    %s322 = sphi 0, %s321
    %s338 = sphi 0, %s322
    %s354 = sphi 0, %s356
    %s357 = sphi 0, %s354
    %s358 = sphi 0, %s357
    %s374 = sphi 0, %s358
    %s390 = sphi 0, %s392
    %s393 = sphi 0, %s390
    %s394 = sphi 0, %s393
    %s410 = sphi 0, %s394
    %s418 = sphi 0, %s420
    %s421 = sphi 0, %s418
    %s422 = sphi 0, %s421
    %s438 = sphi 0, %s422
  $region4: #{head_aux_fuse_loss_for_14_5.1} parent=0 // loop_header_branch
    %21 = sbr.rel (%p19) target = $region8
  $region5: #{head_aux_fuse_loss_for_14_5.1} parent=0 // loop_body
    %s23 = ssub.s32 %s18, 1
    %s24 = ssub.s32 %s18, 2
    %s31 = sadd.s32 1, %s26
    %p32 = scmp.ge.s32.totalorder %s31, 1
    %s33 = scalar_select %p32, 0, %s31
    %s34 = sadd.s32 1, %s25
    %s35 = scalar_select %p32, %s34, %s25
    %p36 = scmp.ge.s32.totalorder %s35, 2
    %s37 = scalar_select %p36, 0, %s35
    %s38 = ssub.s32 %s25, %s37
    %s39 = ssub.s32 %s26, %s33
    %s40 = sor.u32 %s38, %s39
    %p41 = scmp.eq.s32.totalorder %s40, 0
    %s43 = sadd.s32 %s42, 1
    %s44 = scalar_select %p41, %s42, %s43
    %p47 = pneg %p41
    %p48 = scmp.eq.s32.totalorder %s18, 1
    %p49 = por %p47, %p48
    %p50 = scmp.ne.s32.totalorder %s42, %s45
    %p51 = scmp.eq.s32.totalorder %s18, 0
    %p52 = por %p50, %p51
    %p53 = scmp.ne.s32.totalorder %s42, %s45
    %p54 = scmp.eq.s32.totalorder %s23, 1
    %p55 = por %p53, %p54
    %p56 = scmp.ne.s32.totalorder %s45, %s46
    %p57 = scmp.eq.s32.totalorder %s23, 0
    %p58 = por %p56, %p57
    %p59 = scmp.ne.s32.totalorder %s45, %s46
    %p60 = scmp.eq.s32.totalorder %s24, 1
    %p61 = por %p59, %p60
    %p63 = scmp.ne.s32.totalorder %s46, %s62
    %p64 = scmp.eq.s32.totalorder %s24, 0
    %p65 = por %p63, %p64
    %s66 = ssub.s32 %s25, %s37
    %s67 = ssub.s32 %s26, %s33
    %s68 = sor.u32 %s66, %s67
    %p69 = scmp.eq.s32.totalorder %s68, 0
    %s71 = sadd.s32 %s70, 1
    %s72 = scalar_select %p69, %s70, %s71
    %p75 = pneg %p69
    %p76 = scmp.eq.s32.totalorder %s18, 1
    %p77 = por %p75, %p76
    %p78 = scmp.ne.s32.totalorder %s70, %s73
    %p79 = scmp.eq.s32.totalorder %s18, 0
    %p80 = por %p78, %p79
    %p81 = scmp.ne.s32.totalorder %s70, %s73
    %p82 = scmp.eq.s32.totalorder %s23, 1
    %p83 = por %p81, %p82
    %p84 = scmp.ne.s32.totalorder %s73, %s74
    %p85 = scmp.eq.s32.totalorder %s23, 0
    %p86 = por %p84, %p85
    %p87 = scmp.ne.s32.totalorder %s73, %s74
    %p88 = scmp.eq.s32.totalorder %s24, 1
    %p89 = por %p87, %p88
    %p91 = scmp.ne.s32.totalorder %s74, %s90
    %p92 = scmp.eq.s32.totalorder %s24, 0
    %p93 = por %p91, %p92
    %s94 = ssub.s32 %s25, %s37
    %s95 = ssub.s32 %s26, %s33
    %s96 = sor.u32 %s94, %s95
    %p97 = scmp.eq.s32.totalorder %s96, 0
    %s99 = sadd.s32 %s98, 1
    %s100 = scalar_select %p97, %s98, %s99
    %p103 = pneg %p97
    %p104 = scmp.eq.s32.totalorder %s18, 1
    %p105 = por %p103, %p104
    %p106 = scmp.ne.s32.totalorder %s98, %s101
    %p107 = scmp.eq.s32.totalorder %s18, 0
    %p108 = por %p106, %p107
    %p109 = scmp.ne.s32.totalorder %s98, %s101
    %p110 = scmp.eq.s32.totalorder %s23, 1
    %p111 = por %p109, %p110
    %p112 = scmp.ne.s32.totalorder %s101, %s102
    %p113 = scmp.eq.s32.totalorder %s23, 0
    %p114 = por %p112, %p113
    %p115 = scmp.ne.s32.totalorder %s101, %s102
    %p116 = scmp.eq.s32.totalorder %s24, 1
    %p117 = por %p115, %p116
    %p119 = scmp.ne.s32.totalorder %s102, %s118
    %p120 = scmp.eq.s32.totalorder %s24, 0
    %p121 = por %p119, %p120
    %s122 = ssub.s32 %s25, %s37
    %s123 = ssub.s32 %s26, %s33
    %s124 = sor.u32 %s122, %s123
    %p125 = scmp.eq.s32.totalorder %s124, 0
    %s127 = sadd.s32 %s126, 1
    %s128 = scalar_select %p125, %s126, %s127
    %p131 = pneg %p125
    %p132 = scmp.eq.s32.totalorder %s18, 1
    %p133 = por %p131, %p132
    %p134 = scmp.ne.s32.totalorder %s126, %s129
    %p135 = scmp.eq.s32.totalorder %s18, 0
    %p136 = por %p134, %p135
    %p137 = scmp.ne.s32.totalorder %s126, %s129
    %p138 = scmp.eq.s32.totalorder %s23, 1
    %p139 = por %p137, %p138
    %p140 = scmp.ne.s32.totalorder %s129, %s130
    %p141 = scmp.eq.s32.totalorder %s23, 0
    %p142 = por %p140, %p141
    %p143 = scmp.ne.s32.totalorder %s129, %s130
    %p144 = scmp.eq.s32.totalorder %s24, 1
    %p145 = por %p143, %p144
    %p147 = scmp.ne.s32.totalorder %s130, %s146
    %p148 = scmp.eq.s32.totalorder %s24, 0
    %p149 = por %p147, %p148
    %s150 = ssub.s32 %s25, %s37
    %s151 = ssub.s32 %s26, %s33
    %s152 = sor.u32 %s150, %s151
    %p153 = scmp.eq.s32.totalorder %s152, 0
    %s155 = sadd.s32 %s154, 1
    %s156 = scalar_select %p153, %s154, %s155
    %p159 = pneg %p153
    %p160 = scmp.eq.s32.totalorder %s18, 1
    %p161 = por %p159, %p160
    %p162 = scmp.ne.s32.totalorder %s154, %s157
    %p163 = scmp.eq.s32.totalorder %s18, 0
    %p164 = por %p162, %p163
    %p165 = scmp.ne.s32.totalorder %s154, %s157
    %p166 = scmp.eq.s32.totalorder %s23, 1
    %p167 = por %p165, %p166
    %p168 = scmp.ne.s32.totalorder %s157, %s158
    %p169 = scmp.eq.s32.totalorder %s23, 0
    %p170 = por %p168, %p169
    %p171 = scmp.ne.s32.totalorder %s157, %s158
    %p172 = scmp.eq.s32.totalorder %s24, 1
    %p173 = por %p171, %p172
    %p175 = scmp.ne.s32.totalorder %s158, %s174
    %p176 = scmp.eq.s32.totalorder %s24, 0
    %p177 = por %p175, %p176
    %s178 = ssub.s32 %s25, %s37
    %s179 = ssub.s32 %s26, %s33
    %s180 = sor.u32 %s178, %s179
    %p181 = scmp.eq.s32.totalorder %s180, 0
    %s183 = sadd.s32 %s182, 1
    %s184 = scalar_select %p181, %s182, %s183
    %p187 = pneg %p181
    %p188 = scmp.eq.s32.totalorder %s18, 1
    %p189 = por %p187, %p188
    %p190 = scmp.ne.s32.totalorder %s182, %s185
    %p191 = scmp.eq.s32.totalorder %s18, 0
    %p192 = por %p190, %p191
    %p193 = scmp.ne.s32.totalorder %s182, %s185
    %p194 = scmp.eq.s32.totalorder %s23, 1
    %p195 = por %p193, %p194
    %p196 = scmp.ne.s32.totalorder %s185, %s186
    %p197 = scmp.eq.s32.totalorder %s23, 0
    %p198 = por %p196, %p197
    %p199 = scmp.ne.s32.totalorder %s185, %s186
    %p200 = scmp.eq.s32.totalorder %s24, 1
    %p201 = por %p199, %p200
    %p203 = scmp.ne.s32.totalorder %s186, %s202
    %p204 = scmp.eq.s32.totalorder %s24, 0
    %p205 = por %p203, %p204
    %s206 = ssub.s32 %s25, %s37
    %s207 = ssub.s32 %s26, %s33
    %s208 = sor.u32 %s206, %s207
    %p209 = scmp.eq.s32.totalorder %s208, 0
    %s211 = sadd.s32 %s210, 1
    %s212 = scalar_select %p209, %s210, %s211
    %p215 = pneg %p209
    %p216 = scmp.eq.s32.totalorder %s18, 1
    %p217 = por %p215, %p216
    %p218 = scmp.ne.s32.totalorder %s210, %s213
    %p219 = scmp.eq.s32.totalorder %s18, 0
    %p220 = por %p218, %p219
    %p221 = scmp.ne.s32.totalorder %s210, %s213
    %p222 = scmp.eq.s32.totalorder %s23, 1
    %p223 = por %p221, %p222
    %p224 = scmp.ne.s32.totalorder %s213, %s214
    %p225 = scmp.eq.s32.totalorder %s23, 0
    %p226 = por %p224, %p225
    %p227 = scmp.ne.s32.totalorder %s213, %s214
    %p228 = scmp.eq.s32.totalorder %s24, 1
    %p229 = por %p227, %p228
    %p231 = scmp.ne.s32.totalorder %s214, %s230
    %p232 = scmp.eq.s32.totalorder %s24, 0
    %p233 = por %p231, %p232
    %s234 = sadd.s32 %s26, 1
    %s235 = smul.u32 %s234, 2
    %p236 = scmp.lt.s32.totalorder %s235, 1
    %s237 = scalar_select %p236, %s235, 1
    %s238 = sadd.s32 %s33, 1
    %s239 = smul.u32 %s238, 2
    %p240 = scmp.lt.s32.totalorder %s239, 1
    %s241 = scalar_select %p240, %s239, 1
    %s242 = ssub.s32 %s25, %s37
    %s243 = ssub.s32 %s237, %s241
    %s244 = sor.u32 %s242, %s243
    %p245 = scmp.eq.s32.totalorder %s244, 0
    %s247 = sadd.s32 %s246, 1
    %s248 = scalar_select %p245, %s246, %s247
    %p251 = pneg %p245
    %p252 = scmp.eq.s32.totalorder %s18, 1
    %p253 = por %p251, %p252
    %p254 = scmp.ne.s32.totalorder %s246, %s249
    %p255 = scmp.eq.s32.totalorder %s18, 0
    %p256 = por %p254, %p255
    %p257 = scmp.ne.s32.totalorder %s246, %s249
    %p258 = scmp.eq.s32.totalorder %s23, 1
    %p259 = por %p257, %p258
    %p260 = scmp.ne.s32.totalorder %s249, %s250
    %p261 = scmp.eq.s32.totalorder %s23, 0
    %p262 = por %p260, %p261
    %p263 = scmp.ne.s32.totalorder %s249, %s250
    %p264 = scmp.eq.s32.totalorder %s24, 1
    %p265 = por %p263, %p264
    %p267 = scmp.ne.s32.totalorder %s250, %s266
    %p268 = scmp.eq.s32.totalorder %s24, 0
    %p269 = por %p267, %p268
    %s270 = sadd.s32 %s26, 1
    %s271 = smul.u32 %s270, 2
    %p272 = scmp.lt.s32.totalorder %s271, 1
    %s273 = scalar_select %p272, %s271, 1
    %s274 = sadd.s32 %s33, 1
    %s275 = smul.u32 %s274, 2
    %p276 = scmp.lt.s32.totalorder %s275, 1
    %s277 = scalar_select %p276, %s275, 1
    %s278 = ssub.s32 %s25, %s37
    %s279 = ssub.s32 %s273, %s277
    %s280 = sor.u32 %s278, %s279
    %p281 = scmp.eq.s32.totalorder %s280, 0
    %s283 = sadd.s32 %s282, 1
    %s284 = scalar_select %p281, %s282, %s283
    %p287 = pneg %p281
    %p288 = scmp.eq.s32.totalorder %s18, 1
    %p289 = por %p287, %p288
    %p290 = scmp.ne.s32.totalorder %s282, %s285
    %p291 = scmp.eq.s32.totalorder %s18, 0
    %p292 = por %p290, %p291
    %p293 = scmp.ne.s32.totalorder %s282, %s285
    %p294 = scmp.eq.s32.totalorder %s23, 1
    %p295 = por %p293, %p294
    %p296 = scmp.ne.s32.totalorder %s285, %s286
    %p297 = scmp.eq.s32.totalorder %s23, 0
    %p298 = por %p296, %p297
    %p299 = scmp.ne.s32.totalorder %s285, %s286
    %p300 = scmp.eq.s32.totalorder %s24, 1
    %p301 = por %p299, %p300
    %p303 = scmp.ne.s32.totalorder %s286, %s302
    %p304 = scmp.eq.s32.totalorder %s24, 0
    %p305 = por %p303, %p304
    %s306 = sadd.s32 %s26, 1
    %s307 = smul.u32 %s306, 2
    %p308 = scmp.lt.s32.totalorder %s307, 1
    %s309 = scalar_select %p308, %s307, 1
    %s310 = sadd.s32 %s33, 1
    %s311 = smul.u32 %s310, 2
    %p312 = scmp.lt.s32.totalorder %s311, 1
    %s313 = scalar_select %p312, %s311, 1
    %s314 = ssub.s32 %s25, %s37
    %s315 = ssub.s32 %s309, %s313
    %s316 = sor.u32 %s314, %s315
    %p317 = scmp.eq.s32.totalorder %s316, 0
    %s319 = sadd.s32 %s318, 1
    %s320 = scalar_select %p317, %s318, %s319
    %p323 = pneg %p317
    %p324 = scmp.eq.s32.totalorder %s18, 1
    %p325 = por %p323, %p324
    %p326 = scmp.ne.s32.totalorder %s318, %s321
    %p327 = scmp.eq.s32.totalorder %s18, 0
    %p328 = por %p326, %p327
    %p329 = scmp.ne.s32.totalorder %s318, %s321
    %p330 = scmp.eq.s32.totalorder %s23, 1
    %p331 = por %p329, %p330
    %p332 = scmp.ne.s32.totalorder %s321, %s322
    %p333 = scmp.eq.s32.totalorder %s23, 0
    %p334 = por %p332, %p333
    %p335 = scmp.ne.s32.totalorder %s321, %s322
    %p336 = scmp.eq.s32.totalorder %s24, 1
    %p337 = por %p335, %p336
    %p339 = scmp.ne.s32.totalorder %s322, %s338
    %p340 = scmp.eq.s32.totalorder %s24, 0
    %p341 = por %p339, %p340
    %s342 = sadd.s32 %s26, 1
    %s343 = smul.u32 %s342, 2
    %p344 = scmp.lt.s32.totalorder %s343, 1
    %s345 = scalar_select %p344, %s343, 1
    %s346 = sadd.s32 %s33, 1
    %s347 = smul.u32 %s346, 2
    %p348 = scmp.lt.s32.totalorder %s347, 1
    %s349 = scalar_select %p348, %s347, 1
    %s350 = ssub.s32 %s25, %s37
    %s351 = ssub.s32 %s345, %s349
    %s352 = sor.u32 %s350, %s351
    %p353 = scmp.eq.s32.totalorder %s352, 0
    %s355 = sadd.s32 %s354, 1
    %s356 = scalar_select %p353, %s354, %s355
    %p359 = pneg %p353
    %p360 = scmp.eq.s32.totalorder %s18, 1
    %p361 = por %p359, %p360
    %p362 = scmp.ne.s32.totalorder %s354, %s357
    %p363 = scmp.eq.s32.totalorder %s18, 0
    %p364 = por %p362, %p363
    %p365 = scmp.ne.s32.totalorder %s354, %s357
    %p366 = scmp.eq.s32.totalorder %s23, 1
    %p367 = por %p365, %p366
    %p368 = scmp.ne.s32.totalorder %s357, %s358
    %p369 = scmp.eq.s32.totalorder %s23, 0
    %p370 = por %p368, %p369
    %p371 = scmp.ne.s32.totalorder %s357, %s358
    %p372 = scmp.eq.s32.totalorder %s24, 1
    %p373 = por %p371, %p372
    %p375 = scmp.ne.s32.totalorder %s358, %s374
    %p376 = scmp.eq.s32.totalorder %s24, 0
    %p377 = por %p375, %p376
    %s378 = sadd.s32 %s26, 1
    %s379 = smul.u32 %s378, 2
    %p380 = scmp.lt.s32.totalorder %s379, 1
    %s381 = scalar_select %p380, %s379, 1
    %s382 = sadd.s32 %s33, 1
    %s383 = smul.u32 %s382, 2
    %p384 = scmp.lt.s32.totalorder %s383, 1
    %s385 = scalar_select %p384, %s383, 1
    %s386 = ssub.s32 %s25, %s37
    %s387 = ssub.s32 %s381, %s385
    %s388 = sor.u32 %s386, %s387
    %p389 = scmp.eq.s32.totalorder %s388, 0
    %s391 = sadd.s32 %s390, 1
    %s392 = scalar_select %p389, %s390, %s391
    %p395 = pneg %p389
    %p396 = scmp.eq.s32.totalorder %s18, 1
    %p397 = por %p395, %p396
    %p398 = scmp.ne.s32.totalorder %s390, %s393
    %p399 = scmp.eq.s32.totalorder %s18, 0
    %p400 = por %p398, %p399
    %p401 = scmp.ne.s32.totalorder %s390, %s393
    %p402 = scmp.eq.s32.totalorder %s23, 1
    %p403 = por %p401, %p402
    %p404 = scmp.ne.s32.totalorder %s393, %s394
    %p405 = scmp.eq.s32.totalorder %s23, 0
    %p406 = por %p404, %p405
    %p407 = scmp.ne.s32.totalorder %s393, %s394
    %p408 = scmp.eq.s32.totalorder %s24, 1
    %p409 = por %p407, %p408
    %p411 = scmp.ne.s32.totalorder %s394, %s410
    %p412 = scmp.eq.s32.totalorder %s24, 0
    %p413 = por %p411, %p412
    %s414 = ssub.s32 %s25, %s37
    %s415 = ssub.s32 %s26, %s33
    %s416 = sor.u32 %s414, %s415
    %p417 = scmp.eq.s32.totalorder %s416, 0
    %s419 = sadd.s32 %s418, 1
    %s420 = scalar_select %p417, %s418, %s419
    %p423 = pneg %p417
    %p424 = scmp.eq.s32.totalorder %s18, 1
    %p425 = por %p423, %p424
    %p426 = scmp.ne.s32.totalorder %s418, %s421
    %p427 = scmp.eq.s32.totalorder %s18, 0
    %p428 = por %p426, %p427
    %p429 = scmp.ne.s32.totalorder %s418, %s421
    %p430 = scmp.eq.s32.totalorder %s23, 1
    %p431 = por %p429, %p430
    %p432 = scmp.ne.s32.totalorder %s421, %s422
    %p433 = scmp.eq.s32.totalorder %s23, 0
    %p434 = por %p432, %p433
    %p435 = scmp.ne.s32.totalorder %s421, %s422
    %p436 = scmp.eq.s32.totalorder %s24, 1
    %p437 = por %p435, %p436
    %p439 = scmp.ne.s32.totalorder %s422, %s438
    %p440 = scmp.eq.s32.totalorder %s24, 0
    %p441 = por %p439, %p440
    %p442 = scmp.le.s32.totalorder 1, %s18
    %p443 = scmp.lt.s32.totalorder %s18, 3
    %p444 = pnand %p442, %p443
    %p445 = pneg %p444
    // Predicated region
    $region9: #{head_aux_fuse_loss_for_14_5.1} parent=5 // pred_check
      _
    $region10: #{head_aux_fuse_loss_for_14_5.1} parent=5 // pred_check_branch
      %447 = sbr.rel (%p444) target = $region12
    $region11: #{head_aux_fuse_loss_for_14_5.1} parent=5 // pred_region
      %s448 = ssub.s32 %s18, 1
    $region12: #{head_aux_fuse_loss_for_14_5.1} parent=5 // pred_fallthru
      _
    %p449 = scmp.lt.s32.totalorder %s18, 2
    // Predicated region
    $region13: #{head_aux_fuse_loss_for_14_5.1} parent=5 // pred_check
      %p450 = pneg %p449
    $region14: #{head_aux_fuse_loss_for_14_5.1} parent=5 // pred_check_branch
      %452 = sbr.rel (%p450) target = $region16
    $region15: #{head_aux_fuse_loss_for_14_5.1} parent=5 // pred_region
      // Predicated region
      $region17: #{head_aux_fuse_loss_for_14_5.1} parent=15 // pred_check
        %p453 = pneg %p52
      $region18: #{head_aux_fuse_loss_for_14_5.1} parent=15 // pred_check_branch
        %455 = sbr.rel (%p453) target = $region20
      $region19: #{head_aux_fuse_loss_for_14_5.1} parent=15 // pred_region
        %s456 = smul.u32 2, %s26
        %p457 = scmp.lt.s32.totalorder %s25, 1
        %s458 = scalar_select %p457, %s25, 1
        %p459 = scmp.lt.s32.totalorder %s456, 1
        %s460 = scalar_select %p459, %s456, 1
        %s461 = smul.addr %s458, 2
        %s462 = sadd.s32 %s460, %s461
        %s463 = smul.addr %s462, 8
        %s464 = scalar_lea.vmem %s0, %s463
        %s465 = smul.u32 2, %s26
      $region20: #{head_aux_fuse_loss_for_14_5.1} parent=15 // pred_fallthru
        _
      // Predicated region
      $region21: #{head_aux_fuse_loss_for_14_5.1} parent=15 // pred_check
        %p466 = pneg %p80
      $region22: #{head_aux_fuse_loss_for_14_5.1} parent=15 // pred_check_branch
        %468 = sbr.rel (%p466) target = $region24
      $region23: #{head_aux_fuse_loss_for_14_5.1} parent=15 // pred_region
        %s469 = smul.u32 2, %s26
        %p470 = scmp.lt.s32.totalorder %s25, 1
        %s471 = scalar_select %p470, %s25, 1
        %p472 = scmp.lt.s32.totalorder %s469, 1
        %s473 = scalar_select %p472, %s469, 1
        %s474 = smul.addr %s471, 2
        %s475 = sadd.s32 %s473, %s474
        %s476 = smul.addr %s475, 8
        %s477 = scalar_lea.vmem %s1, %s476
        %s478 = smul.u32 2, %s26
      $region24: #{head_aux_fuse_loss_for_14_5.1} parent=15 // pred_fallthru
        _
      // Predicated region
      $region25: #{head_aux_fuse_loss_for_14_5.1} parent=15 // pred_check
        %p479 = pneg %p108
      $region26: #{head_aux_fuse_loss_for_14_5.1} parent=15 // pred_check_branch
        %481 = sbr.rel (%p479) target = $region28
      $region27: #{head_aux_fuse_loss_for_14_5.1} parent=15 // pred_region
        %s482 = smul.u32 2, %s26
        %p483 = scmp.lt.s32.totalorder %s25, 1
        %s484 = scalar_select %p483, %s25, 1
        %p485 = scmp.lt.s32.totalorder %s482, 1
        %s486 = scalar_select %p485, %s482, 1
        %s487 = smul.addr %s484, 2
        %s488 = sadd.s32 %s486, %s487
        %s489 = smul.addr %s488, 8
        %s490 = scalar_lea.vmem %s2, %s489
        %s491 = smul.u32 2, %s26
      $region28: #{head_aux_fuse_loss_for_14_5.1} parent=15 // pred_fallthru
        _
      // Predicated region
      $region29: #{head_aux_fuse_loss_for_14_5.1} parent=15 // pred_check
        %p492 = pneg %p136
      $region30: #{head_aux_fuse_loss_for_14_5.1} parent=15 // pred_check_branch
        %494 = sbr.rel (%p492) target = $region32
      $region31: #{head_aux_fuse_loss_for_14_5.1} parent=15 // pred_region
        %s495 = smul.u32 2, %s26
        %p496 = scmp.lt.s32.totalorder %s25, 1
        %s497 = scalar_select %p496, %s25, 1
        %p498 = scmp.lt.s32.totalorder %s495, 1
        %s499 = scalar_select %p498, %s495, 1
        %s500 = smul.addr %s497, 2
        %s501 = sadd.s32 %s499, %s500
        %s502 = smul.addr %s501, 8
        %s503 = scalar_lea.vmem %s3, %s502
        %s504 = smul.u32 2, %s26
      $region32: #{head_aux_fuse_loss_for_14_5.1} parent=15 // pred_fallthru
        _
      // Predicated region
      $region33: #{head_aux_fuse_loss_for_14_5.1} parent=15 // pred_check
        %p505 = pneg %p164
      $region34: #{head_aux_fuse_loss_for_14_5.1} parent=15 // pred_check_branch
        %507 = sbr.rel (%p505) target = $region36
      $region35: #{head_aux_fuse_loss_for_14_5.1} parent=15 // pred_region
        %s508 = smul.u32 2, %s26
        %p509 = scmp.lt.s32.totalorder %s25, 1
        %s510 = scalar_select %p509, %s25, 1
        %p511 = scmp.lt.s32.totalorder %s508, 1
        %s512 = scalar_select %p511, %s508, 1
        %s513 = smul.addr %s510, 2
        %s514 = sadd.s32 %s512, %s513
        %s515 = smul.addr %s514, 8
        %s516 = scalar_lea.vmem %s4, %s515
        %s517 = smul.u32 2, %s26
      $region36: #{head_aux_fuse_loss_for_14_5.1} parent=15 // pred_fallthru
        _
      // Predicated region
      $region37: #{head_aux_fuse_loss_for_14_5.1} parent=15 // pred_check
        %p518 = pneg %p192
      $region38: #{head_aux_fuse_loss_for_14_5.1} parent=15 // pred_check_branch
        %520 = sbr.rel (%p518) target = $region40
      $region39: #{head_aux_fuse_loss_for_14_5.1} parent=15 // pred_region
        %s521 = smul.u32 2, %s26
        %p522 = scmp.lt.s32.totalorder %s25, 1
        %s523 = scalar_select %p522, %s25, 1
        %p524 = scmp.lt.s32.totalorder %s521, 1
        %s525 = scalar_select %p524, %s521, 1
        %s526 = smul.addr %s523, 2
        %s527 = sadd.s32 %s525, %s526
        %s528 = smul.addr %s527, 8
        %s529 = scalar_lea.vmem %s5, %s528
        %s530 = smul.u32 2, %s26
      $region40: #{head_aux_fuse_loss_for_14_5.1} parent=15 // pred_fallthru
        _
      // Predicated region
      $region41: #{head_aux_fuse_loss_for_14_5.1} parent=15 // pred_check
        %p531 = pneg %p220
      $region42: #{head_aux_fuse_loss_for_14_5.1} parent=15 // pred_check_branch
        %533 = sbr.rel (%p531) target = $region44
      $region43: #{head_aux_fuse_loss_for_14_5.1} parent=15 // pred_region
        %s534 = smul.u32 2, %s26
        %p535 = scmp.lt.s32.totalorder %s25, 1
        %s536 = scalar_select %p535, %s25, 1
        %p537 = scmp.lt.s32.totalorder %s534, 1
        %s538 = scalar_select %p537, %s534, 1
        %s539 = smul.addr %s536, 2
        %s540 = sadd.s32 %s538, %s539
        %s541 = smul.addr %s540, 8
        %s542 = scalar_lea.vmem %s6, %s541
        %s543 = smul.u32 2, %s26
      $region44: #{head_aux_fuse_loss_for_14_5.1} parent=15 // pred_fallthru
        _
      // Predicated region
      $region45: #{head_aux_fuse_loss_for_14_5.1} parent=15 // pred_check
        %p544 = pneg %p256
      $region46: #{head_aux_fuse_loss_for_14_5.1} parent=15 // pred_check_branch
        %546 = sbr.rel (%p544) target = $region48
      $region47: #{head_aux_fuse_loss_for_14_5.1} parent=15 // pred_region
        %s547 = sadd.s32 %s26, 1
        %s548 = smul.u32 %s547, 2
        %p549 = scmp.lt.s32.totalorder %s548, 1
        %s550 = scalar_select %p549, %s548, 1
        %p551 = scmp.lt.s32.totalorder %s25, 1
        %s552 = scalar_select %p551, %s25, 1
        %p553 = scmp.lt.s32.totalorder %s550, 1
        %s554 = scalar_select %p553, %s550, 1
        %s555 = smul.addr %s552, 2
        %s556 = sadd.s32 %s554, %s555
        %s557 = smul.addr %s556, 8
        %s558 = scalar_lea.vmem %s7, %s557
        %s559 = sadd.s32 %s26, 1
        %s560 = smul.u32 %s559, 2
        %p561 = scmp.lt.s32.totalorder %s560, 1
        %s562 = scalar_select %p561, %s560, 1
      $region48: #{head_aux_fuse_loss_for_14_5.1} parent=15 // pred_fallthru
        _
      // Predicated region
      $region49: #{head_aux_fuse_loss_for_14_5.1} parent=15 // pred_check
        %p563 = pneg %p292
      $region50: #{head_aux_fuse_loss_for_14_5.1} parent=15 // pred_check_branch
        %565 = sbr.rel (%p563) target = $region52
      $region51: #{head_aux_fuse_loss_for_14_5.1} parent=15 // pred_region
        %s566 = sadd.s32 %s26, 1
        %s567 = smul.u32 %s566, 2
        %p568 = scmp.lt.s32.totalorder %s567, 1
        %s569 = scalar_select %p568, %s567, 1
        %p570 = scmp.lt.s32.totalorder %s25, 1
        %s571 = scalar_select %p570, %s25, 1
        %p572 = scmp.lt.s32.totalorder %s569, 1
        %s573 = scalar_select %p572, %s569, 1
        %s574 = smul.addr %s571, 2
        %s575 = sadd.s32 %s573, %s574
        %s576 = smul.addr %s575, 8
        %s577 = scalar_lea.vmem %s8, %s576
        %s578 = sadd.s32 %s26, 1
        %s579 = smul.u32 %s578, 2
        %p580 = scmp.lt.s32.totalorder %s579, 1
        %s581 = scalar_select %p580, %s579, 1
      $region52: #{head_aux_fuse_loss_for_14_5.1} parent=15 // pred_fallthru
        _
      // Predicated region
      $region53: #{head_aux_fuse_loss_for_14_5.1} parent=15 // pred_check
        %p582 = pneg %p328
      $region54: #{head_aux_fuse_loss_for_14_5.1} parent=15 // pred_check_branch
        %584 = sbr.rel (%p582) target = $region56
      $region55: #{head_aux_fuse_loss_for_14_5.1} parent=15 // pred_region
        %s585 = sadd.s32 %s26, 1
        %s586 = smul.u32 %s585, 2
        %p587 = scmp.lt.s32.totalorder %s586, 1
        %s588 = scalar_select %p587, %s586, 1
        %p589 = scmp.lt.s32.totalorder %s25, 1
        %s590 = scalar_select %p589, %s25, 1
        %p591 = scmp.lt.s32.totalorder %s588, 1
        %s592 = scalar_select %p591, %s588, 1
        %s593 = smul.addr %s590, 2
        %s594 = sadd.s32 %s592, %s593
        %s595 = smul.addr %s594, 8
        %s596 = scalar_lea.vmem %s9, %s595
        %s597 = sadd.s32 %s26, 1
        %s598 = smul.u32 %s597, 2
        %p599 = scmp.lt.s32.totalorder %s598, 1
        %s600 = scalar_select %p599, %s598, 1
      $region56: #{head_aux_fuse_loss_for_14_5.1} parent=15 // pred_fallthru
        _
      // Predicated region
      $region57: #{head_aux_fuse_loss_for_14_5.1} parent=15 // pred_check
        %p601 = pneg %p364
      $region58: #{head_aux_fuse_loss_for_14_5.1} parent=15 // pred_check_branch
        %603 = sbr.rel (%p601) target = $region60
      $region59: #{head_aux_fuse_loss_for_14_5.1} parent=15 // pred_region
        %s604 = sadd.s32 %s26, 1
        %s605 = smul.u32 %s604, 2
        %p606 = scmp.lt.s32.totalorder %s605, 1
        %s607 = scalar_select %p606, %s605, 1
        %p608 = scmp.lt.s32.totalorder %s25, 1
        %s609 = scalar_select %p608, %s25, 1
        %p610 = scmp.lt.s32.totalorder %s607, 1
        %s611 = scalar_select %p610, %s607, 1
        %s612 = smul.addr %s609, 2
        %s613 = sadd.s32 %s611, %s612
        %s614 = smul.addr %s613, 8
        %s615 = scalar_lea.vmem %s10, %s614
        %s616 = sadd.s32 %s26, 1
        %s617 = smul.u32 %s616, 2
        %p618 = scmp.lt.s32.totalorder %s617, 1
        %s619 = scalar_select %p618, %s617, 1
      $region60: #{head_aux_fuse_loss_for_14_5.1} parent=15 // pred_fallthru
        _
      // Predicated region
      $region61: #{head_aux_fuse_loss_for_14_5.1} parent=15 // pred_check
        %p620 = pneg %p400
      $region62: #{head_aux_fuse_loss_for_14_5.1} parent=15 // pred_check_branch
        %622 = sbr.rel (%p620) target = $region64
      $region63: #{head_aux_fuse_loss_for_14_5.1} parent=15 // pred_region
        %s623 = sadd.s32 %s26, 1
        %s624 = smul.u32 %s623, 2
        %p625 = scmp.lt.s32.totalorder %s624, 1
        %s626 = scalar_select %p625, %s624, 1
        %p627 = scmp.lt.s32.totalorder %s25, 1
        %s628 = scalar_select %p627, %s25, 1
        %p629 = scmp.lt.s32.totalorder %s626, 1
        %s630 = scalar_select %p629, %s626, 1
        %s631 = smul.addr %s628, 2
        %s632 = sadd.s32 %s630, %s631
        %s633 = smul.addr %s632, 8
        %s634 = scalar_lea.vmem %s11, %s633
        %s635 = sadd.s32 %s26, 1
        %s636 = smul.u32 %s635, 2
        %p637 = scmp.lt.s32.totalorder %s636, 1
        %s638 = scalar_select %p637, %s636, 1
      $region64: #{head_aux_fuse_loss_for_14_5.1} parent=15 // pred_fallthru
        _
    $region16: #{head_aux_fuse_loss_for_14_5.1} parent=5 // pred_fallthru
      _
    %p639 = scmp.le.s32.totalorder 1, %s18
    %p640 = scmp.lt.s32.totalorder %s18, 3
    %p641 = pnand %p639, %p640
    %p642 = pneg %p641
    // Predicated region
    $region65: #{head_aux_fuse_loss_for_14_5.1} parent=5 // pred_check
      _
    $region66: #{head_aux_fuse_loss_for_14_5.1} parent=5 // pred_check_branch
      %644 = sbr.rel (%p641) target = $region68
    $region67: #{head_aux_fuse_loss_for_14_5.1} parent=5 // pred_region
      %s645 = ssub.s32 %s18, 1
      %s646 = smul.u32 2, %s28
      %p647 = scmp.lt.s32.totalorder %s27, 1
      %s648 = scalar_select %p647, %s27, 1
      %p649 = scmp.lt.s32.totalorder %s646, 1
      %s650 = scalar_select %p649, %s646, 1
      %s651 = smul.addr %s648, 2
      %s652 = sadd.s32 %s650, %s651
      %s653 = smul.addr %s652, 8
      %s654 = scalar_lea.vmem %s0, %s653
      %p655 = pneg %p58
      %p656 = pneg %p55
      %s657 = smul.u32 2, %s28
      %p658 = scmp.lt.s32.totalorder %s27, 1
      %s659 = scalar_select %p658, %s27, 1
      %p660 = scmp.lt.s32.totalorder %s657, 1
      %s661 = scalar_select %p660, %s657, 1
      %s662 = smul.addr %s659, 2
      %s663 = sadd.s32 %s661, %s662
      %s664 = smul.addr %s663, 8
      %s665 = scalar_lea.vmem %s1, %s664
      %p666 = pneg %p86
      %p667 = pneg %p83
      %s668 = smul.u32 2, %s28
      %p669 = scmp.lt.s32.totalorder %s27, 1
      %s670 = scalar_select %p669, %s27, 1
      %p671 = scmp.lt.s32.totalorder %s668, 1
      %s672 = scalar_select %p671, %s668, 1
      %s673 = smul.addr %s670, 2
      %s674 = sadd.s32 %s672, %s673
      %s675 = smul.addr %s674, 8
      %s676 = scalar_lea.vmem %s2, %s675
      %p677 = pneg %p114
      %p678 = pneg %p111
      %s679 = smul.u32 2, %s28
      %p680 = scmp.lt.s32.totalorder %s27, 1
      %s681 = scalar_select %p680, %s27, 1
      %p682 = scmp.lt.s32.totalorder %s679, 1
      %s683 = scalar_select %p682, %s679, 1
      %s684 = smul.addr %s681, 2
      %s685 = sadd.s32 %s683, %s684
      %s686 = smul.addr %s685, 8
      %s687 = scalar_lea.vmem %s3, %s686
      %p688 = pneg %p142
      %p689 = pneg %p139
      %s690 = smul.u32 2, %s28
      %p691 = scmp.lt.s32.totalorder %s27, 1
      %s692 = scalar_select %p691, %s27, 1
      %p693 = scmp.lt.s32.totalorder %s690, 1
      %s694 = scalar_select %p693, %s690, 1
      %s695 = smul.addr %s692, 2
      %s696 = sadd.s32 %s694, %s695
      %s697 = smul.addr %s696, 8
      %s698 = scalar_lea.vmem %s4, %s697
      %p699 = pneg %p170
      %p700 = pneg %p167
      %s701 = smul.u32 2, %s28
      %p702 = scmp.lt.s32.totalorder %s27, 1
      %s703 = scalar_select %p702, %s27, 1
      %p704 = scmp.lt.s32.totalorder %s701, 1
      %s705 = scalar_select %p704, %s701, 1
      %s706 = smul.addr %s703, 2
      %s707 = sadd.s32 %s705, %s706
      %s708 = smul.addr %s707, 8
      %s709 = scalar_lea.vmem %s5, %s708
      %p710 = pneg %p198
      %p711 = pneg %p195
      %s712 = smul.u32 2, %s28
      %p713 = scmp.lt.s32.totalorder %s27, 1
      %s714 = scalar_select %p713, %s27, 1
      %p715 = scmp.lt.s32.totalorder %s712, 1
      %s716 = scalar_select %p715, %s712, 1
      %s717 = smul.addr %s714, 2
      %s718 = sadd.s32 %s716, %s717
      %s719 = smul.addr %s718, 8
      %s720 = scalar_lea.vmem %s6, %s719
      %p721 = pneg %p226
      %p722 = pneg %p223
      %s723 = sadd.s32 %s28, 1
      %s724 = smul.u32 %s723, 2
      %p725 = scmp.lt.s32.totalorder %s724, 1
      %s726 = scalar_select %p725, %s724, 1
      %p727 = scmp.lt.s32.totalorder %s27, 1
      %s728 = scalar_select %p727, %s27, 1
      %p729 = scmp.lt.s32.totalorder %s726, 1
      %s730 = scalar_select %p729, %s726, 1
      %s731 = smul.addr %s728, 2
      %s732 = sadd.s32 %s730, %s731
      %s733 = smul.addr %s732, 8
      %s734 = scalar_lea.vmem %s7, %s733
      %p735 = pneg %p262
      %p736 = pneg %p259
      %s737 = sadd.s32 %s28, 1
      %s738 = smul.u32 %s737, 2
      %p739 = scmp.lt.s32.totalorder %s738, 1
      %s740 = scalar_select %p739, %s738, 1
      %p741 = scmp.lt.s32.totalorder %s27, 1
      %s742 = scalar_select %p741, %s27, 1
      %p743 = scmp.lt.s32.totalorder %s740, 1
      %s744 = scalar_select %p743, %s740, 1
      %s745 = smul.addr %s742, 2
      %s746 = sadd.s32 %s744, %s745
      %s747 = smul.addr %s746, 8
      %s748 = scalar_lea.vmem %s8, %s747
      %p749 = pneg %p298
      %p750 = pneg %p295
      %s751 = sadd.s32 %s28, 1
      %s752 = smul.u32 %s751, 2
      %p753 = scmp.lt.s32.totalorder %s752, 1
      %s754 = scalar_select %p753, %s752, 1
      %p755 = scmp.lt.s32.totalorder %s27, 1
      %s756 = scalar_select %p755, %s27, 1
      %p757 = scmp.lt.s32.totalorder %s754, 1
      %s758 = scalar_select %p757, %s754, 1
      %s759 = smul.addr %s756, 2
      %s760 = sadd.s32 %s758, %s759
      %s761 = smul.addr %s760, 8
      %s762 = scalar_lea.vmem %s9, %s761
      %p763 = pneg %p334
      %p764 = pneg %p331
      %s765 = sadd.s32 %s28, 1
      %s766 = smul.u32 %s765, 2
      %p767 = scmp.lt.s32.totalorder %s766, 1
      %s768 = scalar_select %p767, %s766, 1
      %p769 = scmp.lt.s32.totalorder %s27, 1
      %s770 = scalar_select %p769, %s27, 1
      %p771 = scmp.lt.s32.totalorder %s768, 1
      %s772 = scalar_select %p771, %s768, 1
      %s773 = smul.addr %s770, 2
      %s774 = sadd.s32 %s772, %s773
      %s775 = smul.addr %s774, 8
      %s776 = scalar_lea.vmem %s10, %s775
      %p777 = pneg %p370
      %p778 = pneg %p367
      %s779 = sadd.s32 %s28, 1
      %s780 = smul.u32 %s779, 2
      %p781 = scmp.lt.s32.totalorder %s780, 1
      %s782 = scalar_select %p781, %s780, 1
      %p783 = scmp.lt.s32.totalorder %s27, 1
      %s784 = scalar_select %p783, %s27, 1
      %p785 = scmp.lt.s32.totalorder %s782, 1
      %s786 = scalar_select %p785, %s782, 1
      %s787 = smul.addr %s784, 2
      %s788 = sadd.s32 %s786, %s787
      %s789 = smul.addr %s788, 8
      %s790 = scalar_lea.vmem %s11, %s789
      %p791 = pneg %p406
      %p792 = pneg %p403
      %p793 = pneg %p434
      %p794 = pneg %p431
      %p795 = scmp.lt.s32.totalorder %s27, 1
      %s796 = scalar_select %p795, %s27, 1
      %p797 = scmp.lt.s32.totalorder %s28, 0
      %s798 = scalar_select %p797, %s28, 0
      %s799 = smul.addr %s798, 2
      %s800 = smul.addr %s796, 2
      %s801 = sadd.s32 %s799, %s800
      %s802 = smul.addr %s801, 8
      %s803 = scalar_lea.vmem %s12, %s802
      %s804 = smul.u32 2, %s28
      %p805 = scmp.lt.s32.totalorder %s27, 1
      %s806 = scalar_select %p805, %s27, 1
      %p807 = scmp.lt.s32.totalorder %s804, 1
      %s808 = scalar_select %p807, %s804, 1
      %s809 = smul.addr %s806, 2
      %s810 = sadd.s32 %s808, %s809
      %s811 = smul.addr %s810, 8
      %s812 = scalar_lea.vmem %s0, %s811
      %s813 = smul.u32 2, %s28
      %s814 = smul.u32 2, %s28
      %p815 = scmp.lt.s32.totalorder %s27, 1
      %s816 = scalar_select %p815, %s27, 1
      %p817 = scmp.lt.s32.totalorder %s814, 1
      %s818 = scalar_select %p817, %s814, 1
      %s819 = smul.addr %s816, 2
      %s820 = sadd.s32 %s818, %s819
      %s821 = smul.addr %s820, 8
      %s822 = scalar_lea.vmem %s1, %s821
      %s823 = smul.u32 2, %s28
      %s824 = smul.u32 2, %s28
      %p825 = scmp.lt.s32.totalorder %s27, 1
      %s826 = scalar_select %p825, %s27, 1
      %p827 = scmp.lt.s32.totalorder %s824, 1
      %s828 = scalar_select %p827, %s824, 1
      %s829 = smul.addr %s826, 2
      %s830 = sadd.s32 %s828, %s829
      %s831 = smul.addr %s830, 8
      %s832 = scalar_lea.vmem %s2, %s831
      %s833 = smul.u32 2, %s28
      %s834 = smul.u32 2, %s28
      %p835 = scmp.lt.s32.totalorder %s27, 1
      %s836 = scalar_select %p835, %s27, 1
      %p837 = scmp.lt.s32.totalorder %s834, 1
      %s838 = scalar_select %p837, %s834, 1
      %s839 = smul.addr %s836, 2
      %s840 = sadd.s32 %s838, %s839
      %s841 = smul.addr %s840, 8
      %s842 = scalar_lea.vmem %s3, %s841
      %s843 = smul.u32 2, %s28
      %s844 = smul.u32 2, %s28
      %p845 = scmp.lt.s32.totalorder %s27, 1
      %s846 = scalar_select %p845, %s27, 1
      %p847 = scmp.lt.s32.totalorder %s844, 1
      %s848 = scalar_select %p847, %s844, 1
      %s849 = smul.addr %s846, 2
      %s850 = sadd.s32 %s848, %s849
      %s851 = smul.addr %s850, 8
      %s852 = scalar_lea.vmem %s4, %s851
      %s853 = smul.u32 2, %s28
      %s854 = smul.u32 2, %s28
      %p855 = scmp.lt.s32.totalorder %s27, 1
      %s856 = scalar_select %p855, %s27, 1
      %p857 = scmp.lt.s32.totalorder %s854, 1
      %s858 = scalar_select %p857, %s854, 1
      %s859 = smul.addr %s856, 2
      %s860 = sadd.s32 %s858, %s859
      %s861 = smul.addr %s860, 8
      %s862 = scalar_lea.vmem %s5, %s861
      %s863 = smul.u32 2, %s28
      %s864 = smul.u32 2, %s28
      %p865 = scmp.lt.s32.totalorder %s27, 1
      %s866 = scalar_select %p865, %s27, 1
      %p867 = scmp.lt.s32.totalorder %s864, 1
      %s868 = scalar_select %p867, %s864, 1
      %s869 = smul.addr %s866, 2
      %s870 = sadd.s32 %s868, %s869
      %s871 = smul.addr %s870, 8
      %s872 = scalar_lea.vmem %s6, %s871
      %s873 = smul.u32 2, %s28
      %s874 = sadd.s32 %s28, 1
      %s875 = smul.u32 %s874, 2
      %p876 = scmp.lt.s32.totalorder %s875, 1
      %s877 = scalar_select %p876, %s875, 1
      %p878 = scmp.lt.s32.totalorder %s27, 1
      %s879 = scalar_select %p878, %s27, 1
      %p880 = scmp.lt.s32.totalorder %s877, 1
      %s881 = scalar_select %p880, %s877, 1
      %s882 = smul.addr %s879, 2
      %s883 = sadd.s32 %s881, %s882
      %s884 = smul.addr %s883, 8
      %s885 = scalar_lea.vmem %s7, %s884
      %s886 = sadd.s32 %s28, 1
      %s887 = smul.u32 %s886, 2
      %p888 = scmp.lt.s32.totalorder %s887, 1
      %s889 = scalar_select %p888, %s887, 1
      %s890 = sadd.s32 %s28, 1
      %s891 = smul.u32 %s890, 2
      %p892 = scmp.lt.s32.totalorder %s891, 1
      %s893 = scalar_select %p892, %s891, 1
      %p894 = scmp.lt.s32.totalorder %s27, 1
      %s895 = scalar_select %p894, %s27, 1
      %p896 = scmp.lt.s32.totalorder %s893, 1
      %s897 = scalar_select %p896, %s893, 1
      %s898 = smul.addr %s895, 2
      %s899 = sadd.s32 %s897, %s898
      %s900 = smul.addr %s899, 8
      %s901 = scalar_lea.vmem %s8, %s900
      %s902 = sadd.s32 %s28, 1
      %s903 = smul.u32 %s902, 2
      %p904 = scmp.lt.s32.totalorder %s903, 1
      %s905 = scalar_select %p904, %s903, 1
      %s906 = sadd.s32 %s28, 1
      %s907 = smul.u32 %s906, 2
      %p908 = scmp.lt.s32.totalorder %s907, 1
      %s909 = scalar_select %p908, %s907, 1
      %p910 = scmp.lt.s32.totalorder %s27, 1
      %s911 = scalar_select %p910, %s27, 1
      %p912 = scmp.lt.s32.totalorder %s909, 1
      %s913 = scalar_select %p912, %s909, 1
      %s914 = smul.addr %s911, 2
      %s915 = sadd.s32 %s913, %s914
      %s916 = smul.addr %s915, 8
      %s917 = scalar_lea.vmem %s9, %s916
      %s918 = sadd.s32 %s28, 1
      %s919 = smul.u32 %s918, 2
      %p920 = scmp.lt.s32.totalorder %s919, 1
      %s921 = scalar_select %p920, %s919, 1
      %s922 = sadd.s32 %s28, 1
      %s923 = smul.u32 %s922, 2
      %p924 = scmp.lt.s32.totalorder %s923, 1
      %s925 = scalar_select %p924, %s923, 1
      %p926 = scmp.lt.s32.totalorder %s27, 1
      %s927 = scalar_select %p926, %s27, 1
      %p928 = scmp.lt.s32.totalorder %s925, 1
      %s929 = scalar_select %p928, %s925, 1
      %s930 = smul.addr %s927, 2
      %s931 = sadd.s32 %s929, %s930
      %s932 = smul.addr %s931, 8
      %s933 = scalar_lea.vmem %s10, %s932
      %s934 = sadd.s32 %s28, 1
      %s935 = smul.u32 %s934, 2
      %p936 = scmp.lt.s32.totalorder %s935, 1
      %s937 = scalar_select %p936, %s935, 1
      %s938 = sadd.s32 %s28, 1
      %s939 = smul.u32 %s938, 2
      %p940 = scmp.lt.s32.totalorder %s939, 1
      %s941 = scalar_select %p940, %s939, 1
      %p942 = scmp.lt.s32.totalorder %s27, 1
      %s943 = scalar_select %p942, %s27, 1
      %p944 = scmp.lt.s32.totalorder %s941, 1
      %s945 = scalar_select %p944, %s941, 1
      %s946 = smul.addr %s943, 2
      %s947 = sadd.s32 %s945, %s946
      %s948 = smul.addr %s947, 8
      %s949 = scalar_lea.vmem %s11, %s948
      %s950 = sadd.s32 %s28, 1
      %s951 = smul.u32 %s950, 2
      %p952 = scmp.lt.s32.totalorder %s951, 1
      %s953 = scalar_select %p952, %s951, 1
      %p954 = scmp.lt.s32.totalorder %s27, 1
      %s955 = scalar_select %p954, %s27, 1
      %p956 = scmp.lt.s32.totalorder %s28, 0
      %s957 = scalar_select %p956, %s28, 0
      %s958 = smul.addr %s957, 2
      %s959 = smul.addr %s955, 2
      %s960 = sadd.s32 %s958, %s959
      %s961 = smul.addr %s960, 8
      %s962 = scalar_lea.vmem %s12, %s961
      %s963 = smul.u32 %s28, 16
      %v964 = vld [vmem:[%s812] sm:$0xff]
      %v965 = vld [vmem:[%s812 + $0x8] sm:$0xff]
      %v966 = vld [vmem:[%s822] sm:$0xff]
      %v967 = vld [vmem:[%s822 + $0x8] sm:$0xff]
      %v968 = vld [vmem:[%s832] sm:$0xff]
      %v969 = vld [vmem:[%s832 + $0x8] sm:$0xff]
      %v970 = vld [vmem:[%s842] sm:$0xff]
      %v971 = vld [vmem:[%s842 + $0x8] sm:$0xff]
      %v972 = vld [vmem:[%s852] sm:$0xff]
      %v973 = vld [vmem:[%s852 + $0x8] sm:$0xff]
      %v974 = vld [vmem:[%s862] sm:$0xff]
      %v975 = vld [vmem:[%s862 + $0x8] sm:$0xff]
      %v976 = vld [vmem:[%s872] sm:$0xff]
      %v977 = vld [vmem:[%s872 + $0x8] sm:$0xff]
      %v978 = vlaneseq
      %v979 = vshrl.u32 %v978, 7
      %v980 = vadd.s32 %v979, 8
      %v981 = vstv %s963
      %v982 = vadd.s32 %v981, %v979
      %v983 = vadd.s32 %v981, %v980
      %v984 = vlaneseq
      %v985 = vand.u32 %v984, 127
      %vm986 = vcmp.lt.s32.totalorder %v982, 14
      %vm987 = vcmp.lt.s32.totalorder %v983, 14
      %vm988 = vcmp.lt.s32.totalorder %v985, 126
      %vm989 = vmand %vm986, %vm988
      %vm990 = vmand %vm987, %vm988
      %v991 = vld [vmem:[%s949] sm:$0xff]
      %vm995 = vcmask 1046528
      %v996 = vrot.slane %v972, 1
      %v997 = vrot.slane %v973, 1
      %v998 = vsel %vm995, %v996, %v997
      %v999 = vrot.slane %v991, 1
      %v1000 = vsel %vm995, %v997, %v999
      %1003 = vrot.lane.b32.xlu0 %v998, 126
      %v1004 = vpop.permute.xlu0 %1003
      %1005 = vrot.lane.b32.xlu0 %v1000, 126
      %v1006 = vpop.permute.xlu0 %1005
      %vm1009 = vcmask 1040384
      %v1010 = vrot.slane %v1004, 7
      %v1011 = vrot.slane %v1006, 7
      %v1012 = vsel %vm1009, %v1010, %v1011
      %v1016 = vsub.f32 %v972, %v1010
      %v1017 = vsub.f32 %v973, %v1012
      %v1018 = vsub.f32 %v991, %v1011
      %vm1019 = vcmask 1045504
      %v1020 = vrot.slane %v972, 2
      %v1021 = vrot.slane %v973, 2
      %v1022 = vsel %vm1019, %v1020, %v1021
      %v1023 = vrot.slane %v991, 2
      %v1024 = vsel %vm1019, %v1021, %v1023
      %v1027 = vsub.f32 %v972, %v1022
      %v1028 = vsub.f32 %v973, %v1024
      %1029 = vrot.lane.b32.xlu0 %v1027, 127
      %v1030 = vpop.permute.xlu0 %1029
      %1031 = vrot.lane.b32.xlu0 %v1028, 127
      %v1032 = vpop.permute.xlu0 %1031
      %v1033 = vmul.f32 %v1016, %v1016
      %v1034 = vmul.f32 %v1017, %v1017
      %v1035 = vmul.f32 %v1018, %v1018
      %v1036 = vmul.f32 %v1030, %v1030
      %v1037 = vmul.f32 %v1032, %v1032
      %v1040 = vrot.slane %v1036, 7
      %v1041 = vrot.slane %v1037, 7
      %v1042 = vsel %vm1009, %v1040, %v1041
      %v1046 = vadd.f32 %v1033, %v1040
      %v1047 = vadd.f32 %v1034, %v1042
      %v1048 = vadd.f32 %v1035, %v1041
      %v1049 = vrsqrt.pop %v1046
      %v1050 = vmul.f32 %v1046, %v1049
      %vm1051 = vcmp.eq.f32.partialorder %v1046, inf
      %v1052 = vsel %vm1051, %v1046, %v1050
      %vm1053 = vcmp.eq.f32.partialorder %v1046, 0.0
      %v1054 = vand.u32 %v1046, 2147483648
      %v1055 = vsel %vm1053, %v1054, %v1052
      %v1056 = vrsqrt.pop %v1047
      %v1057 = vmul.f32 %v1047, %v1056
      %vm1058 = vcmp.eq.f32.partialorder %v1047, inf
      %v1059 = vsel %vm1058, %v1047, %v1057
      %vm1060 = vcmp.eq.f32.partialorder %v1047, 0.0
      %v1061 = vand.u32 %v1047, 2147483648
      %v1062 = vsel %vm1060, %v1061, %v1059
      %v1063 = vrsqrt.pop %v1048
      %v1064 = vmul.f32 %v1048, %v1063
      %vm1065 = vcmp.eq.f32.partialorder %v1048, inf
      %v1066 = vsel %vm1065, %v1048, %v1064
      %vm1067 = vcmp.eq.f32.partialorder %v1048, 0.0
      %v1068 = vand.u32 %v1048, 2147483648
      %v1069 = vsel %vm1067, %v1068, %v1066
      %v1070 = vsub.f32 1.0, %v972
      %v1071 = vsub.f32 1.0, %v973
      %vm1072 = vcmp.gt.f32.partialorder %v972, 0.5
      %vm1073 = vcmp.gt.f32.partialorder %v973, 0.5
      %v1074 = vsub.f32 1.0, %v964
      %v1075 = vsub.f32 1.0, %v965
      %v1076 = vsub.f32 1.0, %v966
      %v1077 = vsub.f32 1.0, %v967
      %v1078 = vsub.f32 1.0, %v968
      %v1079 = vsub.f32 1.0, %v969
      %v1080 = vsub.f32 1.0, %v970
      %v1081 = vsub.f32 1.0, %v971
      %v1082 = vsel %vm1072, %v964, %v1074
      %v1083 = vsel %vm1073, %v965, %v1075
      %v1084 = vlog2.pop %v1082
      %v1085 = vmul.f32 %v1084, 0.6931472
      %v1086 = vlog2.pop %v1083
      %v1087 = vmul.f32 %v1086, 0.6931472
      %v1088 = vmax.f32 %v1085, -100.0
      %v1089 = vmax.f32 %v1087, -100.0
      %v1090 = vsub.f32 0.0, %v1088
      %v1091 = vsub.f32 0.0, %v1089
      %v1092 = vadd.f32 %v1090, %v1091
      %v1093 = vrot.slane %v1092, 4
      %v1094 = vadd.f32 %v1092, %v1093
      %v1095 = vrot.slane %v1094, 2
      %v1096 = vadd.f32 %v1094, %v1095
      %v1097 = vrot.slane %v1096, 1
      %v1098 = vadd.f32 %v1096, %v1097
      %v1099 = vld [vmem:[%s885] sm:$0xff]
      %v1103 = vrot.slane %v964, 1
      %v1104 = vrot.slane %v965, 1
      %v1105 = vsel %vm995, %v1103, %v1104
      %v1106 = vrot.slane %v1099, 1
      %v1107 = vsel %vm995, %v1104, %v1106
      %1110 = vrot.lane.b32.xlu0 %v1105, 126
      %v1111 = vpop.permute.xlu0 %1110
      %1112 = vrot.lane.b32.xlu0 %v1107, 126
      %v1113 = vpop.permute.xlu0 %1112
      %v1116 = vrot.slane %v1111, 7
      %v1117 = vrot.slane %v1113, 7
      %v1118 = vsel %vm1009, %v1116, %v1117
      %v1122 = vsub.f32 %v964, %v1116
      %v1123 = vsub.f32 %v965, %v1118
      %v1124 = vsub.f32 %v1099, %v1117
      %v1125 = vrot.slane %v964, 2
      %v1126 = vrot.slane %v965, 2
      %v1127 = vsel %vm1019, %v1125, %v1126
      %v1128 = vrot.slane %v1099, 2
      %v1129 = vsel %vm1019, %v1126, %v1128
      %v1132 = vsub.f32 %v964, %v1127
      %v1133 = vsub.f32 %v965, %v1129
      %1134 = vrot.lane.b32.xlu0 %v1132, 127
      %v1135 = vpop.permute.xlu0 %1134
      %1136 = vrot.lane.b32.xlu0 %v1133, 127
      %v1137 = vpop.permute.xlu0 %1136
      %v1138 = vmul.f32 %v1122, %v1122
      %v1139 = vmul.f32 %v1123, %v1123
      %v1140 = vmul.f32 %v1124, %v1124
      %v1141 = vmul.f32 %v1135, %v1135
      %v1142 = vmul.f32 %v1137, %v1137
      %v1145 = vrot.slane %v1141, 7
      %v1146 = vrot.slane %v1142, 7
      %v1147 = vsel %vm1009, %v1145, %v1146
      %v1151 = vadd.f32 %v1138, %v1145
      %v1152 = vadd.f32 %v1139, %v1147
      %v1153 = vadd.f32 %v1140, %v1146
      %v1154 = vrsqrt.pop %v1151
      %v1155 = vmul.f32 %v1151, %v1154
      %vm1156 = vcmp.eq.f32.partialorder %v1151, inf
      %v1157 = vsel %vm1156, %v1151, %v1155
      %vm1158 = vcmp.eq.f32.partialorder %v1151, 0.0
      %v1159 = vand.u32 %v1151, 2147483648
      %v1160 = vsel %vm1158, %v1159, %v1157
      %v1161 = vrsqrt.pop %v1152
      %v1162 = vmul.f32 %v1152, %v1161
      %vm1163 = vcmp.eq.f32.partialorder %v1152, inf
      %v1164 = vsel %vm1163, %v1152, %v1162
      %vm1165 = vcmp.eq.f32.partialorder %v1152, 0.0
      %v1166 = vand.u32 %v1152, 2147483648
      %v1167 = vsel %vm1165, %v1166, %v1164
      %v1168 = vrsqrt.pop %v1153
      %v1169 = vmul.f32 %v1153, %v1168
      %vm1170 = vcmp.eq.f32.partialorder %v1153, inf
      %v1171 = vsel %vm1170, %v1153, %v1169
      %vm1172 = vcmp.eq.f32.partialorder %v1153, 0.0
      %v1173 = vand.u32 %v1153, 2147483648
      %v1174 = vsel %vm1172, %v1173, %v1171
      %v1175 = vsub.f32 %v1160, %v1055
      %v1176 = vsub.f32 %v1167, %v1062
      %v1177 = vsub.f32 %v1174, %v1069
      %v1178 = vand.u32 2147483647, %v1175
      %v1179 = vand.u32 2147483647, %v1176
      %v1180 = vand.u32 2147483647, %v1177
      %vm1181 = vcmp.lt.f32.partialorder %v1178, 1.0
      %vm1182 = vcmp.lt.f32.partialorder %v1179, 1.0
      %vm1183 = vcmp.lt.f32.partialorder %v1180, 1.0
      %v1184 = vmul.f32 %v1175, 0.5
      %v1185 = vmul.f32 %v1176, 0.5
      %v1186 = vmul.f32 %v1177, 0.5
      %v1187 = vmul.f32 %v1184, %v1175
      %v1188 = vmul.f32 %v1185, %v1176
      %v1189 = vmul.f32 %v1186, %v1177
      %v1190 = vsub.f32 %v1178, 0.5
      %v1191 = vsub.f32 %v1179, 0.5
      %v1192 = vsub.f32 %v1180, 0.5
      %v1193 = vsel %vm1181, %v1187, %v1190
      %v1194 = vsel %vm1182, %v1188, %v1191
      %v1195 = vsel %vm1183, %v1189, %v1192
      %v1199 = vrot.slane %v1193, 1
      %v1200 = vrot.slane %v1194, 1
      %v1201 = vsel %vm995, %v1199, %v1200
      %v1202 = vrot.slane %v1195, 1
      %v1203 = vsel %vm995, %v1200, %v1202
      %v1206 = vsel %vm989, %v1201, 0.0
      %v1207 = vsel %vm990, %v1203, 0.0
      %v1208 = vadd.f32 %v1206, %v1207
      %v1209 = vrot.slane %v1208, 4
      %v1210 = vadd.f32 %v1208, %v1209
      %v1211 = vrot.slane %v1210, 2
      %v1212 = vadd.f32 %v1210, %v1211
      %v1213 = vrot.slane %v1212, 1
      %v1214 = vadd.f32 %v1212, %v1213
      %v1215 = vsel %vm1072, %v966, %v1076
      %v1216 = vsel %vm1073, %v967, %v1077
      %v1217 = vlog2.pop %v1215
      %v1218 = vmul.f32 %v1217, 0.6931472
      %v1219 = vlog2.pop %v1216
      %v1220 = vmul.f32 %v1219, 0.6931472
      %v1221 = vmax.f32 %v1218, -100.0
      %v1222 = vmax.f32 %v1220, -100.0
      %v1223 = vsub.f32 0.0, %v1221
      %v1224 = vsub.f32 0.0, %v1222
      %v1225 = vadd.f32 %v1223, %v1224
      %v1226 = vrot.slane %v1225, 4
      %v1227 = vadd.f32 %v1225, %v1226
      %v1228 = vrot.slane %v1227, 2
      %v1229 = vadd.f32 %v1227, %v1228
      %v1230 = vrot.slane %v1229, 1
      %v1231 = vadd.f32 %v1229, %v1230
      %v1232 = vld [vmem:[%s901] sm:$0xff]
      %v1236 = vrot.slane %v966, 1
      %v1237 = vrot.slane %v967, 1
      %v1238 = vsel %vm995, %v1236, %v1237
      %v1239 = vrot.slane %v1232, 1
      %v1240 = vsel %vm995, %v1237, %v1239
      %1243 = vrot.lane.b32.xlu0 %v1238, 126
      %v1244 = vpop.permute.xlu0 %1243
      %1245 = vrot.lane.b32.xlu0 %v1240, 126
      %v1246 = vpop.permute.xlu0 %1245
      %v1249 = vrot.slane %v1244, 7
      %v1250 = vrot.slane %v1246, 7
      %v1251 = vsel %vm1009, %v1249, %v1250
      %v1255 = vsub.f32 %v966, %v1249
      %v1256 = vsub.f32 %v967, %v1251
      %v1257 = vsub.f32 %v1232, %v1250
      %v1258 = vrot.slane %v966, 2
      %v1259 = vrot.slane %v967, 2
      %v1260 = vsel %vm1019, %v1258, %v1259
      %v1261 = vrot.slane %v1232, 2
      %v1262 = vsel %vm1019, %v1259, %v1261
      %v1265 = vsub.f32 %v966, %v1260
      %v1266 = vsub.f32 %v967, %v1262
      %1267 = vrot.lane.b32.xlu0 %v1265, 127
      %v1268 = vpop.permute.xlu0 %1267
      %1269 = vrot.lane.b32.xlu0 %v1266, 127
      %v1270 = vpop.permute.xlu0 %1269
      %v1271 = vmul.f32 %v1255, %v1255
      %v1272 = vmul.f32 %v1256, %v1256
      %v1273 = vmul.f32 %v1257, %v1257
      %v1274 = vmul.f32 %v1268, %v1268
      %v1275 = vmul.f32 %v1270, %v1270
      %v1278 = vrot.slane %v1274, 7
      %v1279 = vrot.slane %v1275, 7
      %v1280 = vsel %vm1009, %v1278, %v1279
      %v1284 = vadd.f32 %v1271, %v1278
      %v1285 = vadd.f32 %v1272, %v1280
      %v1286 = vadd.f32 %v1273, %v1279
      %v1287 = vrsqrt.pop %v1284
      %v1288 = vmul.f32 %v1284, %v1287
      %vm1289 = vcmp.eq.f32.partialorder %v1284, inf
      %v1290 = vsel %vm1289, %v1284, %v1288
      %vm1291 = vcmp.eq.f32.partialorder %v1284, 0.0
      %v1292 = vand.u32 %v1284, 2147483648
      %v1293 = vsel %vm1291, %v1292, %v1290
      %v1294 = vrsqrt.pop %v1285
      %v1295 = vmul.f32 %v1285, %v1294
      %vm1296 = vcmp.eq.f32.partialorder %v1285, inf
      %v1297 = vsel %vm1296, %v1285, %v1295
      %vm1298 = vcmp.eq.f32.partialorder %v1285, 0.0
      %v1299 = vand.u32 %v1285, 2147483648
      %v1300 = vsel %vm1298, %v1299, %v1297
      %v1301 = vrsqrt.pop %v1286
      %v1302 = vmul.f32 %v1286, %v1301
      %vm1303 = vcmp.eq.f32.partialorder %v1286, inf
      %v1304 = vsel %vm1303, %v1286, %v1302
      %vm1305 = vcmp.eq.f32.partialorder %v1286, 0.0
      %v1306 = vand.u32 %v1286, 2147483648
      %v1307 = vsel %vm1305, %v1306, %v1304
      %v1308 = vsub.f32 %v1293, %v1055
      %v1309 = vsub.f32 %v1300, %v1062
      %v1310 = vsub.f32 %v1307, %v1069
      %v1311 = vand.u32 2147483647, %v1308
      %v1312 = vand.u32 2147483647, %v1309
      %v1313 = vand.u32 2147483647, %v1310
      %vm1314 = vcmp.lt.f32.partialorder %v1311, 1.0
      %vm1315 = vcmp.lt.f32.partialorder %v1312, 1.0
      %vm1316 = vcmp.lt.f32.partialorder %v1313, 1.0
      %v1317 = vmul.f32 %v1308, 0.5
      %v1318 = vmul.f32 %v1309, 0.5
      %v1319 = vmul.f32 %v1310, 0.5
      %v1320 = vmul.f32 %v1317, %v1308
      %v1321 = vmul.f32 %v1318, %v1309
      %v1322 = vmul.f32 %v1319, %v1310
      %v1323 = vsub.f32 %v1311, 0.5
      %v1324 = vsub.f32 %v1312, 0.5
      %v1325 = vsub.f32 %v1313, 0.5
      %v1326 = vsel %vm1314, %v1320, %v1323
      %v1327 = vsel %vm1315, %v1321, %v1324
      %v1328 = vsel %vm1316, %v1322, %v1325
      %v1332 = vrot.slane %v1326, 1
      %v1333 = vrot.slane %v1327, 1
      %v1334 = vsel %vm995, %v1332, %v1333
      %v1335 = vrot.slane %v1328, 1
      %v1336 = vsel %vm995, %v1333, %v1335
      %v1339 = vsel %vm989, %v1334, 0.0
      %v1340 = vsel %vm990, %v1336, 0.0
      %v1341 = vadd.f32 %v1339, %v1340
      %v1342 = vrot.slane %v1341, 4
      %v1343 = vadd.f32 %v1341, %v1342
      %v1344 = vrot.slane %v1343, 2
      %v1345 = vadd.f32 %v1343, %v1344
      %v1346 = vrot.slane %v1345, 1
      %v1347 = vadd.f32 %v1345, %v1346
      %v1348 = vsel %vm1072, %v968, %v1078
      %v1349 = vsel %vm1073, %v969, %v1079
      %v1350 = vlog2.pop %v1348
      %v1351 = vmul.f32 %v1350, 0.6931472
      %v1352 = vlog2.pop %v1349
      %v1353 = vmul.f32 %v1352, 0.6931472
      %v1354 = vmax.f32 %v1351, -100.0
      %v1355 = vmax.f32 %v1353, -100.0
      %v1356 = vsub.f32 0.0, %v1354
      %v1357 = vsub.f32 0.0, %v1355
      %v1358 = vadd.f32 %v1356, %v1357
      %v1359 = vrot.slane %v1358, 4
      %v1360 = vadd.f32 %v1358, %v1359
      %v1361 = vrot.slane %v1360, 2
      %v1362 = vadd.f32 %v1360, %v1361
      %v1363 = vrot.slane %v1362, 1
      %v1364 = vadd.f32 %v1362, %v1363
      %v1365 = vld [vmem:[%s917] sm:$0xff]
      %v1369 = vrot.slane %v968, 1
      %v1370 = vrot.slane %v969, 1
      %v1371 = vsel %vm995, %v1369, %v1370
      %v1372 = vrot.slane %v1365, 1
      %v1373 = vsel %vm995, %v1370, %v1372
      %1376 = vrot.lane.b32.xlu0 %v1371, 126
      %v1377 = vpop.permute.xlu0 %1376
      %1378 = vrot.lane.b32.xlu0 %v1373, 126
      %v1379 = vpop.permute.xlu0 %1378
      %v1382 = vrot.slane %v1377, 7
      %v1383 = vrot.slane %v1379, 7
      %v1384 = vsel %vm1009, %v1382, %v1383
      %v1388 = vsub.f32 %v968, %v1382
      %v1389 = vsub.f32 %v969, %v1384
      %v1390 = vsub.f32 %v1365, %v1383
      %v1391 = vrot.slane %v968, 2
      %v1392 = vrot.slane %v969, 2
      %v1393 = vsel %vm1019, %v1391, %v1392
      %v1394 = vrot.slane %v1365, 2
      %v1395 = vsel %vm1019, %v1392, %v1394
      %v1398 = vsub.f32 %v968, %v1393
      %v1399 = vsub.f32 %v969, %v1395
      %1400 = vrot.lane.b32.xlu0 %v1398, 127
      %v1401 = vpop.permute.xlu0 %1400
      %1402 = vrot.lane.b32.xlu0 %v1399, 127
      %v1403 = vpop.permute.xlu0 %1402
      %v1404 = vmul.f32 %v1388, %v1388
      %v1405 = vmul.f32 %v1389, %v1389
      %v1406 = vmul.f32 %v1390, %v1390
      %v1407 = vmul.f32 %v1401, %v1401
      %v1408 = vmul.f32 %v1403, %v1403
      %v1411 = vrot.slane %v1407, 7
      %v1412 = vrot.slane %v1408, 7
      %v1413 = vsel %vm1009, %v1411, %v1412
      %v1417 = vadd.f32 %v1404, %v1411
      %v1418 = vadd.f32 %v1405, %v1413
      %v1419 = vadd.f32 %v1406, %v1412
      %v1420 = vrsqrt.pop %v1417
      %v1421 = vmul.f32 %v1417, %v1420
      %vm1422 = vcmp.eq.f32.partialorder %v1417, inf
      %v1423 = vsel %vm1422, %v1417, %v1421
      %vm1424 = vcmp.eq.f32.partialorder %v1417, 0.0
      %v1425 = vand.u32 %v1417, 2147483648
      %v1426 = vsel %vm1424, %v1425, %v1423
      %v1427 = vrsqrt.pop %v1418
      %v1428 = vmul.f32 %v1418, %v1427
      %vm1429 = vcmp.eq.f32.partialorder %v1418, inf
      %v1430 = vsel %vm1429, %v1418, %v1428
      %vm1431 = vcmp.eq.f32.partialorder %v1418, 0.0
      %v1432 = vand.u32 %v1418, 2147483648
      %v1433 = vsel %vm1431, %v1432, %v1430
      %v1434 = vrsqrt.pop %v1419
      %v1435 = vmul.f32 %v1419, %v1434
      %vm1436 = vcmp.eq.f32.partialorder %v1419, inf
      %v1437 = vsel %vm1436, %v1419, %v1435
      %vm1438 = vcmp.eq.f32.partialorder %v1419, 0.0
      %v1439 = vand.u32 %v1419, 2147483648
      %v1440 = vsel %vm1438, %v1439, %v1437
      %v1441 = vsub.f32 %v1426, %v1055
      %v1442 = vsub.f32 %v1433, %v1062
      %v1443 = vsub.f32 %v1440, %v1069
      %v1444 = vand.u32 2147483647, %v1441
      %v1445 = vand.u32 2147483647, %v1442
      %v1446 = vand.u32 2147483647, %v1443
      %vm1447 = vcmp.lt.f32.partialorder %v1444, 1.0
      %vm1448 = vcmp.lt.f32.partialorder %v1445, 1.0
      %vm1449 = vcmp.lt.f32.partialorder %v1446, 1.0
      %v1450 = vmul.f32 %v1441, 0.5
      %v1451 = vmul.f32 %v1442, 0.5
      %v1452 = vmul.f32 %v1443, 0.5
      %v1453 = vmul.f32 %v1450, %v1441
      %v1454 = vmul.f32 %v1451, %v1442
      %v1455 = vmul.f32 %v1452, %v1443
      %v1456 = vsub.f32 %v1444, 0.5
      %v1457 = vsub.f32 %v1445, 0.5
      %v1458 = vsub.f32 %v1446, 0.5
      %v1459 = vsel %vm1447, %v1453, %v1456
      %v1460 = vsel %vm1448, %v1454, %v1457
      %v1461 = vsel %vm1449, %v1455, %v1458
      %v1465 = vrot.slane %v1459, 1
      %v1466 = vrot.slane %v1460, 1
      %v1467 = vsel %vm995, %v1465, %v1466
      %v1468 = vrot.slane %v1461, 1
      %v1469 = vsel %vm995, %v1466, %v1468
      %v1472 = vsel %vm989, %v1467, 0.0
      %v1473 = vsel %vm990, %v1469, 0.0
      %v1474 = vadd.f32 %v1472, %v1473
      %v1475 = vrot.slane %v1474, 4
      %v1476 = vadd.f32 %v1474, %v1475
      %v1477 = vrot.slane %v1476, 2
      %v1478 = vadd.f32 %v1476, %v1477
      %v1479 = vrot.slane %v1478, 1
      %v1480 = vadd.f32 %v1478, %v1479
      %v1481 = vsel %vm1072, %v970, %v1080
      %v1482 = vsel %vm1073, %v971, %v1081
      %v1483 = vlog2.pop %v1481
      %v1484 = vmul.f32 %v1483, 0.6931472
      %v1485 = vlog2.pop %v1482
      %v1486 = vmul.f32 %v1485, 0.6931472
      %v1487 = vmax.f32 %v1484, -100.0
      %v1488 = vmax.f32 %v1486, -100.0
      %v1489 = vsub.f32 0.0, %v1487
      %v1490 = vsub.f32 0.0, %v1488
      %v1491 = vadd.f32 %v1489, %v1490
      %v1492 = vrot.slane %v1491, 4
      %v1493 = vadd.f32 %v1491, %v1492
      %v1494 = vrot.slane %v1493, 2
      %v1495 = vadd.f32 %v1493, %v1494
      %v1496 = vrot.slane %v1495, 1
      %v1497 = vadd.f32 %v1495, %v1496
      %v1498 = vld [vmem:[%s933] sm:$0xff]
      %v1502 = vrot.slane %v970, 1
      %v1503 = vrot.slane %v971, 1
      %v1504 = vsel %vm995, %v1502, %v1503
      %v1505 = vrot.slane %v1498, 1
      %v1506 = vsel %vm995, %v1503, %v1505
      %1509 = vrot.lane.b32.xlu0 %v1504, 126
      %v1510 = vpop.permute.xlu0 %1509
      %1511 = vrot.lane.b32.xlu0 %v1506, 126
      %v1512 = vpop.permute.xlu0 %1511
      %v1515 = vrot.slane %v1510, 7
      %v1516 = vrot.slane %v1512, 7
      %v1517 = vsel %vm1009, %v1515, %v1516
      %v1521 = vsub.f32 %v970, %v1515
      %v1522 = vsub.f32 %v971, %v1517
      %v1523 = vsub.f32 %v1498, %v1516
      %v1524 = vrot.slane %v970, 2
      %v1525 = vrot.slane %v971, 2
      %v1526 = vsel %vm1019, %v1524, %v1525
      %v1527 = vrot.slane %v1498, 2
      %v1528 = vsel %vm1019, %v1525, %v1527
      %v1531 = vsub.f32 %v970, %v1526
      %v1532 = vsub.f32 %v971, %v1528
      %1533 = vrot.lane.b32.xlu0 %v1531, 127
      %v1534 = vpop.permute.xlu0 %1533
      %1535 = vrot.lane.b32.xlu0 %v1532, 127
      %v1536 = vpop.permute.xlu0 %1535
      %v1537 = vmul.f32 %v1521, %v1521
      %v1538 = vmul.f32 %v1522, %v1522
      %v1539 = vmul.f32 %v1523, %v1523
      %v1540 = vmul.f32 %v1534, %v1534
      %v1541 = vmul.f32 %v1536, %v1536
      %v1544 = vrot.slane %v1540, 7
      %v1545 = vrot.slane %v1541, 7
      %v1546 = vsel %vm1009, %v1544, %v1545
      %v1550 = vadd.f32 %v1537, %v1544
      %v1551 = vadd.f32 %v1538, %v1546
      %v1552 = vadd.f32 %v1539, %v1545
      %v1553 = vrsqrt.pop %v1550
      %v1554 = vmul.f32 %v1550, %v1553
      %vm1555 = vcmp.eq.f32.partialorder %v1550, inf
      %v1556 = vsel %vm1555, %v1550, %v1554
      %vm1557 = vcmp.eq.f32.partialorder %v1550, 0.0
      %v1558 = vand.u32 %v1550, 2147483648
      %v1559 = vsel %vm1557, %v1558, %v1556
      %v1560 = vrsqrt.pop %v1551
      %v1561 = vmul.f32 %v1551, %v1560
      %vm1562 = vcmp.eq.f32.partialorder %v1551, inf
      %v1563 = vsel %vm1562, %v1551, %v1561
      %vm1564 = vcmp.eq.f32.partialorder %v1551, 0.0
      %v1565 = vand.u32 %v1551, 2147483648
      %v1566 = vsel %vm1564, %v1565, %v1563
      %v1567 = vrsqrt.pop %v1552
      %v1568 = vmul.f32 %v1552, %v1567
      %vm1569 = vcmp.eq.f32.partialorder %v1552, inf
      %v1570 = vsel %vm1569, %v1552, %v1568
      %vm1571 = vcmp.eq.f32.partialorder %v1552, 0.0
      %v1572 = vand.u32 %v1552, 2147483648
      %v1573 = vsel %vm1571, %v1572, %v1570
      %v1574 = vsub.f32 %v1559, %v1055
      %v1575 = vsub.f32 %v1566, %v1062
      %v1576 = vsub.f32 %v1573, %v1069
      %v1577 = vand.u32 2147483647, %v1574
      %v1578 = vand.u32 2147483647, %v1575
      %v1579 = vand.u32 2147483647, %v1576
      %vm1580 = vcmp.lt.f32.partialorder %v1577, 1.0
      %vm1581 = vcmp.lt.f32.partialorder %v1578, 1.0
      %vm1582 = vcmp.lt.f32.partialorder %v1579, 1.0
      %v1583 = vmul.f32 %v1574, 0.5
      %v1584 = vmul.f32 %v1575, 0.5
      %v1585 = vmul.f32 %v1576, 0.5
      %v1586 = vmul.f32 %v1583, %v1574
      %v1587 = vmul.f32 %v1584, %v1575
      %v1588 = vmul.f32 %v1585, %v1576
      %v1589 = vsub.f32 %v1577, 0.5
      %v1590 = vsub.f32 %v1578, 0.5
      %v1591 = vsub.f32 %v1579, 0.5
      %v1592 = vsel %vm1580, %v1586, %v1589
      %v1593 = vsel %vm1581, %v1587, %v1590
      %v1594 = vsel %vm1582, %v1588, %v1591
      %v1598 = vrot.slane %v1592, 1
      %v1599 = vrot.slane %v1593, 1
      %v1600 = vsel %vm995, %v1598, %v1599
      %v1601 = vrot.slane %v1594, 1
      %v1602 = vsel %vm995, %v1599, %v1601
      %v1605 = vsel %vm989, %v1600, 0.0
      %v1606 = vsel %vm990, %v1602, 0.0
      %v1607 = vadd.f32 %v1605, %v1606
      %v1608 = vrot.slane %v1607, 4
      %v1609 = vadd.f32 %v1607, %v1608
      %v1610 = vrot.slane %v1609, 2
      %v1611 = vadd.f32 %v1609, %v1610
      %v1612 = vrot.slane %v1611, 1
      %v1613 = vadd.f32 %v1611, %v1612
      %v1614 = vmul.f32 %v966, %v972
      %v1615 = vmul.f32 %v967, %v973
      %v1616 = vmul.f32 %v1076, %v1070
      %v1617 = vmul.f32 %v1077, %v1071
      %v1618 = vadd.f32 %v1614, %v1616
      %v1619 = vadd.f32 %v1615, %v1617
      %v1620 = vmax.f32 %v1618, 0.0
      %v1621 = vmax.f32 %v1619, 0.0
      %v1622 = vmin.f32 %v1620, 1.0
      %v1623 = vmin.f32 %v1621, 1.0
      %v1624 = vsub.f32 1.0, %v1622
      %v1625 = vsub.f32 1.0, %v1623
      %v1626 = vmul.f32 %v968, %v972
      %v1627 = vmul.f32 %v969, %v973
      %v1628 = vmul.f32 %v1078, %v1070
      %v1629 = vmul.f32 %v1079, %v1071
      %v1630 = vadd.f32 %v1626, %v1628
      %v1631 = vadd.f32 %v1627, %v1629
      %v1632 = vmul.f32 %v1624, %v1630
      %v1633 = vmul.f32 %v1625, %v1631
      %v1634 = vmax.f32 %v1632, 0.0
      %v1635 = vmax.f32 %v1633, 0.0
      %v1636 = vmin.f32 %v1634, 1.0
      %v1637 = vmin.f32 %v1635, 1.0
      %v1638 = vsub.f32 1.0, %v974
      %v1639 = vsub.f32 1.0, %v975
      %v1640 = vlog2.pop %v974
      %v1641 = vmul.f32 %v1640, 0.6931472
      %v1642 = vlog2.pop %v975
      %v1643 = vmul.f32 %v1642, 0.6931472
      %v1644 = vmax.f32 %v1641, -100.0
      %v1645 = vmax.f32 %v1643, -100.0
      %v1646 = vmul.f32 %v1622, %v1644
      %v1647 = vmul.f32 %v1623, %v1645
      %v1648 = vlog2.pop %v1638
      %v1649 = vmul.f32 %v1648, 0.6931472
      %v1650 = vlog2.pop %v1639
      %v1651 = vmul.f32 %v1650, 0.6931472
      %v1652 = vmax.f32 %v1649, -100.0
      %v1653 = vmax.f32 %v1651, -100.0
      %v1654 = vmul.f32 %v1624, %v1652
      %v1655 = vmul.f32 %v1625, %v1653
      %v1656 = vadd.f32 %v1646, %v1654
      %v1657 = vadd.f32 %v1647, %v1655
      %v1658 = vsub.f32 0.0, %v1656
      %v1659 = vsub.f32 0.0, %v1657
      %v1660 = vadd.f32 %v1658, %v1659
      %v1661 = vrot.slane %v1660, 4
      %v1662 = vadd.f32 %v1660, %v1661
      %v1663 = vrot.slane %v1662, 2
      %v1664 = vadd.f32 %v1662, %v1663
      %v1665 = vrot.slane %v1664, 1
      %v1666 = vadd.f32 %v1664, %v1665
      %v1667 = vsub.f32 1.0, %v976
      %v1668 = vsub.f32 1.0, %v977
      %v1669 = vsub.f32 1.0, %v1636
      %v1670 = vsub.f32 1.0, %v1637
      %v1671 = vlog2.pop %v976
      %v1672 = vmul.f32 %v1671, 0.6931472
      %v1673 = vlog2.pop %v977
      %v1674 = vmul.f32 %v1673, 0.6931472
      %v1675 = vmax.f32 %v1672, -100.0
      %v1676 = vmax.f32 %v1674, -100.0
      %v1677 = vmul.f32 %v1636, %v1675
      %v1678 = vmul.f32 %v1637, %v1676
      %v1679 = vlog2.pop %v1667
      %v1680 = vmul.f32 %v1679, 0.6931472
      %v1681 = vlog2.pop %v1668
      %v1682 = vmul.f32 %v1681, 0.6931472
      %v1683 = vmax.f32 %v1680, -100.0
      %v1684 = vmax.f32 %v1682, -100.0
      %v1685 = vmul.f32 %v1669, %v1683
      %v1686 = vmul.f32 %v1670, %v1684
      %v1687 = vadd.f32 %v1677, %v1685
      %v1688 = vadd.f32 %v1678, %v1686
      %v1689 = vsub.f32 0.0, %v1687
      %v1690 = vsub.f32 0.0, %v1688
      %v1691 = vadd.f32 %v1689, %v1690
      %v1692 = vrot.slane %v1691, 4
      %v1693 = vadd.f32 %v1691, %v1692
      %v1694 = vrot.slane %v1693, 2
      %v1695 = vadd.f32 %v1693, %v1694
      %v1696 = vrot.slane %v1695, 1
      %v1697 = vadd.f32 %v1695, %v1696
      %v1698 = vsel %vm1009, %v1098, %v1214
      %vm1699 = vcmask 1041408
      %v1700 = vsel %vm1699, %v1698, %v1231
      %vm1701 = vcmask 1042432
      %v1702 = vsel %vm1701, %v1700, %v1347
      %vm1703 = vcmask 1043456
      %v1704 = vsel %vm1703, %v1702, %v1364
      %vm1705 = vcmask 1044480
      %v1706 = vsel %vm1705, %v1704, %v1480
      %v1707 = vsel %vm1019, %v1706, %v1497
      %v1708 = vsel %vm995, %v1707, %v1613
      %v1709 = vsel %vm1009, %v1666, %v1697
      %v1710 = vsel %vm1699, %v1709, 0.0
      %1711 = vst [vmem:[%s962] sm:$0xff] %v1708
      %1712 = vst [vmem:[%s962 + $0x8] sm:$0xff] %v1710
      %p1713 = scmp.lt.s32.totalorder %s27, 1
      %s1714 = scalar_select %p1713, %s27, 1
      %p1715 = scmp.lt.s32.totalorder %s28, 0
      %s1716 = scalar_select %p1715, %s28, 0
      %s1717 = smul.addr %s1716, 2
      %s1718 = smul.addr %s1714, 2
      %s1719 = sadd.s32 %s1717, %s1718
      %s1720 = smul.addr %s1719, 8
      %s1721 = scalar_lea.vmem %s12, %s1720
      // Predicated region
      $region69: #{head_aux_fuse_loss_for_14_5.1} parent=67 // pred_check
        %p1722 = pneg %p431
      $region70: #{head_aux_fuse_loss_for_14_5.1} parent=67 // pred_check_branch
        %1724 = sbr.rel (%p1722) target = $region72
      $region71: #{head_aux_fuse_loss_for_14_5.1} parent=67 // pred_region
        _
      $region72: #{head_aux_fuse_loss_for_14_5.1} parent=67 // pred_fallthru
        _
    $region68: #{head_aux_fuse_loss_for_14_5.1} parent=5 // pred_fallthru
      _
    %p1725 = scmp.le.s32.totalorder 2, %s18
    // Predicated region
    $region73: #{head_aux_fuse_loss_for_14_5.1} parent=5 // pred_check
      %p1726 = pneg %p1725
    $region74: #{head_aux_fuse_loss_for_14_5.1} parent=5 // pred_check_branch
      %1728 = sbr.rel (%p1726) target = $region76
    $region75: #{head_aux_fuse_loss_for_14_5.1} parent=5 // pred_region
      %s1729 = ssub.s32 %s18, 2
      // Predicated region
      $region77: #{head_aux_fuse_loss_for_14_5.1} parent=75 // pred_check
        %p1730 = pneg %p437
      $region78: #{head_aux_fuse_loss_for_14_5.1} parent=75 // pred_check_branch
        %1732 = sbr.rel (%p1730) target = $region80
      $region79: #{head_aux_fuse_loss_for_14_5.1} parent=75 // pred_region
        %p1733 = scmp.lt.s32.totalorder %s29, 1
        %s1734 = scalar_select %p1733, %s29, 1
        %p1735 = scmp.lt.s32.totalorder %s30, 0
        %s1736 = scalar_select %p1735, %s30, 0
        %s1737 = smul.addr %s1736, 2
        %s1738 = smul.addr %s1734, 2
        %s1739 = sadd.s32 %s1737, %s1738
        %s1740 = smul.addr %s1739, 8
        %s1741 = scalar_lea.vmem %s12, %s1740
      $region80: #{head_aux_fuse_loss_for_14_5.1} parent=75 // pred_fallthru
        _
    $region76: #{head_aux_fuse_loss_for_14_5.1} parent=5 // pred_fallthru
      _
  $region6: #{head_aux_fuse_loss_for_14_5.1} parent=0 // loop_footer
    %s22 = sadd.s32 1, %s18
  $region7: #{head_aux_fuse_loss_for_14_5.1} parent=0 // loop_footer_branch
    %17 = sbr.rel target = $region3
  $region8: #{head_aux_fuse_loss_for_14_5.1} parent=0 // loop_exit
    _

</llo_original>
